<compile_context>
chip_gen: v6e
topology: v6e:2x2x1
jax: 0.10.0
libtpu: 0.0.40
codegen_flags: <defaults>
</compile_context>

<pallas_src>
import functools
import math

import jax
import jax.numpy as jnp
from jax import lax
from jax.experimental import pallas as pl
from jax.experimental.pallas import tpu as pltpu


# ----------------------------- shared math -----------------------------------
def _layer_norm(z, gamma, beta, eps):
    mu = jnp.mean(z, axis=-1, keepdims=True)
    var = jnp.mean((z - mu) ** 2, axis=-1, keepdims=True)
    return (z - mu) * lax.rsqrt(var + eps) * gamma + beta


# ----------------------------- Pallas kernel ----------------------------------
def encoder_layer_kernel(x_ref, wqkv_ref, bqkv_ref, wo_ref, bo_ref,
                         w1_ref, b1_ref, w2_ref, b2_ref,
                         g1_ref, be1_ref, g2_ref, be2_ref,
                         gf_ref, bf_ref, o_ref,
                         q_s, k_s, v_s,
                         *, nhead, eps, tq, apply_final_norm):
    # x_ref block: (1, S, D) for batch element b; o_ref block: (1, TQ, D).
    qi = pl.program_id(1)
    d_model = x_ref.shape[-1]
    hd = d_model // nhead
    scale = 1.0 / math.sqrt(hd)

    # ---- once per batch element: fused QKV projection over the full sequence
    @pl.when(qi == 0)
    def _():
        x_full = x_ref[0].astype(jnp.bfloat16)                       # (S, D)
        qkv = jnp.dot(x_full, wqkv_ref[...],
                      preferred_element_type=jnp.float32)            # (S, 3D)
        qkv = qkv + bqkv_ref[...]
        q_s[...] = (qkv[:, :d_model] * scale).astype(jnp.bfloat16)   # pre-scaled Q
        k_s[...] = qkv[:, d_model:2 * d_model].astype(jnp.bfloat16)
        v_s[...] = qkv[:, 2 * d_model:].astype(jnp.bfloat16)

    row0 = pl.multiple_of(qi * tq, tq)
    x_rows = x_ref[0, pl.ds(row0, tq), :].astype(jnp.float32)        # (TQ, D) residual

    q = q_s[pl.ds(row0, tq), :]                                      # (TQ, D) bf16
    k = k_s[...]                                                     # (S, D)  bf16
    v = v_s[...]                                                     # (S, D)  bf16

    # ---- multi-head attention (static unroll over heads, one head's scores
    #      live at a time); per-head contexts concatenated for a single
    #      full-K output projection.
    ctx_heads = []
    for h in range(nhead):
        sl = slice(h * hd, (h + 1) * hd)
        s = lax.dot_general(q[:, sl], k[:, sl], (((1,), (1,)), ((), ())),
                            preferred_element_type=jnp.float32)      # (TQ, S)
        s = s - jnp.max(s, axis=-1, keepdims=True)
        p = jnp.exp(s)
        inv = pl.reciprocal(jnp.sum(p, axis=-1, keepdims=True), approx=True)
        p = (p * inv).astype(jnp.bfloat16)
        ctx_heads.append(jnp.dot(p, v[:, sl],
                                 preferred_element_type=jnp.float32))  # (TQ, hd)
    ctx = jnp.concatenate(ctx_heads, axis=-1).astype(jnp.bfloat16)     # (TQ, D)

    attn = jnp.dot(ctx, wo_ref[...],
                   preferred_element_type=jnp.float32) + bo_ref[...]

    # residual + LayerNorm1 (f32)
    x1 = _layer_norm(x_rows + attn, g1_ref[...], be1_ref[...], eps)

    # feed-forward: relu(x1 @ W1 + b1) @ W2 + b2  (bf16 operands, f32 accum)
    hid = jnp.dot(x1.astype(jnp.bfloat16), w1_ref[...],
                  preferred_element_type=jnp.float32) + b1_ref[...]
    hid = jnp.maximum(hid, 0.0).astype(jnp.bfloat16)
    ff = jnp.dot(hid, w2_ref[...],
                 preferred_element_type=jnp.float32) + b2_ref[...]

    # residual + LayerNorm2 (f32)
    x2 = _layer_norm(x1 + ff, g2_ref[...], be2_ref[...], eps)

    # fused final encoder LayerNorm (last layer only; static flag)
    if apply_final_norm:
        x2 = _layer_norm(x2, gf_ref[...], bf_ref[...], eps)

    o_ref[0] = x2.astype(o_ref.dtype)


# ----------------------------- wrappers ---------------------------------------
def _pick_tq(S):
    # query-tile size: 128 rows when S is large and divisible; else whole S.
    if S > 128 and S % 128 == 0:
        return 128
    return S


def _run_layer(x_bsd, lp, nhead, final_g, final_b, apply_final_norm, eps=1e-5):
    B, S, D = x_bsd.shape
    assert D % nhead == 0
    tq = _pick_tq(S)
    nq = S // tq

    bf16 = jnp.bfloat16
    # fused QKV weight (D, 3D) and bias (1, 3D); all matmul weights pre-cast bf16
    wqkv = jnp.concatenate([lp["wq"].T, lp["wk"].T, lp["wv"].T], axis=1).astype(bf16)
    bqkv = jnp.concatenate([lp["bq"], lp["bk"], lp["bv"]])[None, :].astype(jnp.float32)

    args = (
        x_bsd,
        wqkv, bqkv,
        lp["wo"].T.astype(bf16), lp["bo"][None, :],
        lp["w1"].T.astype(bf16), lp["b1"][None, :],
        lp["w2"].T.astype(bf16), lp["b2"][None, :],
        lp["g1"][None, :], lp["be1"][None, :],
        lp["g2"][None, :], lp["be2"][None, :],
        final_g[None, :], final_b[None, :],
    )
    in_specs = [pl.BlockSpec((1, S, D), lambda b, q: (b, 0, 0))]
    in_specs += [pl.BlockSpec(a.shape, lambda b, q: (0, 0)) for a in args[1:]]

    return pl.pallas_call(
        functools.partial(encoder_layer_kernel, nhead=nhead, eps=eps, tq=tq,
                          apply_final_norm=apply_final_norm),
        grid=(B, nq),
        out_shape=jax.ShapeDtypeStruct((B, S, D), x_bsd.dtype),
        in_specs=in_specs,
        out_specs=pl.BlockSpec((1, tq, D), lambda b, q: (b, q, 0)),
        scratch_shapes=[pltpu.VMEM((S, D), jnp.bfloat16),   # Q (pre-scaled)
                        pltpu.VMEM((S, D), jnp.bfloat16),   # K
                        pltpu.VMEM((S, D), jnp.bfloat16)],  # V
        compiler_params=pltpu.CompilerParams(
            dimension_semantics=("parallel", "arbitrary"),
            vmem_limit_bytes=64 * 1024 * 1024),
    )(*args)


def transformer_encoder(x_sbd, params, nhead, src_key_padding_mask=None):
    """x_sbd: (S, B, d_model), matching PyTorch batch_first=False."""
    # TODO(synk): src_key_padding_mask is not implemented; only None supported.
    assert src_key_padding_mask is None
    x = jnp.transpose(x_sbd, (1, 0, 2))          # (B, S, D)
    n_layers = len(params["layers"])
    for i, lp in enumerate(params["layers"]):
        x = _run_layer(x, lp, nhead,
                       final_g=params["norm_g"], final_b=params["norm_b"],
                       apply_final_norm=(i == n_layers - 1))
    return jnp.transpose(x, (1, 0, 2))           # back to (S, B, D)


# ----------------------------- parameters -------------------------------------
def init_params(key, d_model, num_layers, nhead, dff):
    layers = []
    for l in range(num_layers):
        k = jax.random.fold_in(key, l)
        ks = jax.random.split(k, 12)

        def w(kk, shape, s=0.1):
            return (s * jax.random.normal(kk, shape)).astype(jnp.float32)

        layers.append(dict(
            # PyTorch convention: Linear weight is (out_features, in_features)
            wq=w(ks[0], (d_model, d_model)), bq=w(ks[1], (d_model,), 0.02),
            wk=w(ks[2], (d_model, d_model)), bk=w(ks[3], (d_model,), 0.02),
            wv=w(ks[4], (d_model, d_model)), bv=w(ks[5], (d_model,), 0.02),
            wo=w(ks[6], (d_model, d_model)), bo=w(ks[7], (d_model,), 0.02),
            w1=w(ks[8], (dff, d_model)),     b1=w(ks[9], (dff,), 0.02),
            w2=w(ks[10], (d_model, dff)),    b2=w(ks[11], (d_model,), 0.02),
            g1=jnp.ones((d_model,), jnp.float32),
            be1=jnp.zeros((d_model,), jnp.float32),
            g2=jnp.ones((d_model,), jnp.float32),
            be2=jnp.zeros((d_model,), jnp.float32),
        ))
    return dict(layers=layers,
                norm_g=jnp.ones((d_model,), jnp.float32),
                norm_b=jnp.zeros((d_model,), jnp.float32))


# ----------------------------- pure-JAX reference ------------------------------
def reference_forward(x_sbd, params, nhead, eps=1e-5):
    x = jnp.transpose(x_sbd, (1, 0, 2)).astype(jnp.float32)
    B, S, D = x.shape
    hd = D // nhead
    for lp in params["layers"]:
        q = x @ lp["wq"].T + lp["bq"]
        k = x @ lp["wk"].T + lp["bk"]
        v = x @ lp["wv"].T + lp["bv"]
        qh = q.reshape(B, S, nhead, hd).transpose(0, 2, 1, 3) / math.sqrt(hd)
        kh = k.reshape(B, S, nhead, hd).transpose(0, 2, 1, 3)
        vh = v.reshape(B, S, nhead, hd).transpose(0, 2, 1, 3)
        s = jnp.einsum('bhqe,bhke->bhqk', qh, kh)
        p = jax.nn.softmax(s, axis=-1)
        ctx = jnp.einsum('bhqk,bhke->bhqe', p, vh)
        ctx = ctx.transpose(0, 2, 1, 3).reshape(B, S, D)
        attn = ctx @ lp["wo"].T + lp["bo"]
        x = _layer_norm(x + attn, lp["g1"], lp["be1"], eps)
        h = jax.nn.relu(x @ lp["w1"].T + lp["b1"])
        ff = h @ lp["w2"].T + lp["b2"]
        x = _layer_norm(x + ff, lp["g2"], lp["be2"], eps)
    x = _layer_norm(x, params["norm_g"], params["norm_b"], eps)
    return jnp.transpose(x, (1, 0, 2))


# ----------------------------- main --------------------------------------------
if __name__ == "__main__":
    S, B = 8, 2
    d_model, nhead, dff, num_layers = 32, 4, 64, 2

    key = jax.random.PRNGKey(0)
    params = init_params(jax.random.fold_in(key, 1), d_model, num_layers, nhead, dff)
    x = jax.random.normal(jax.random.fold_in(key, 2), (S, B, d_model), jnp.float32)

    out = transformer_encoder(x, params, nhead)
    out = jax.block_until_ready(out)

    ref = reference_forward(x, params, nhead)
    assert out.shape == (S, B, d_model)
    assert bool(jnp.all(jnp.isfinite(out)))
    # bf16 matmul operands (f32 accumulation) vs an all-f32 reference.
    assert bool(jnp.allclose(out, ref, rtol=3e-2, atol=3e-2)), \
        float(jnp.max(jnp.abs(out - ref)))

    print("KERNEL_OK")
</pallas_src>

<mosaic_0001>
module attributes {stable_mosaic.version = 11 : i64} {
  func.func @encoder_layer_kernel(%arg0: i32, %arg1: i32, %arg2: memref<1x8x32xf32, #tpu.memory_space<vmem>>, %arg3: memref<32x96xbf16, #tpu.memory_space<vmem>>, %arg4: memref<1x96xf32, #tpu.memory_space<vmem>>, %arg5: memref<32x32xbf16, #tpu.memory_space<vmem>>, %arg6: memref<1x32xf32, #tpu.memory_space<vmem>>, %arg7: memref<32x64xbf16, #tpu.memory_space<vmem>>, %arg8: memref<1x64xf32, #tpu.memory_space<vmem>>, %arg9: memref<64x32xbf16, #tpu.memory_space<vmem>>, %arg10: memref<1x32xf32, #tpu.memory_space<vmem>>, %arg11: memref<1x32xf32, #tpu.memory_space<vmem>>, %arg12: memref<1x32xf32, #tpu.memory_space<vmem>>, %arg13: memref<1x32xf32, #tpu.memory_space<vmem>>, %arg14: memref<1x32xf32, #tpu.memory_space<vmem>>, %arg15: memref<1x32xf32, #tpu.memory_space<vmem>>, %arg16: memref<1x32xf32, #tpu.memory_space<vmem>>, %arg17: memref<1x8x32xf32, #tpu.memory_space<vmem>>, %arg18: memref<8x32xbf16, #tpu.memory_space<vmem>>, %arg19: memref<8x32xbf16, #tpu.memory_space<vmem>>, %arg20: memref<8x32xbf16, #tpu.memory_space<vmem>>) attributes {dimension_semantics = [#tpu.dimension_semantics<parallel>, #tpu.dimension_semantics<arbitrary>], iteration_bounds = array<i64: 2, 1>, scalar_prefetch = 0 : i64, scratch_operands = 3 : i64, tpu.core_type = #tpu.core_type<tc>, window_params = [{transform_indices = @transform_0, window_bounds = array<i64: 1, 8, 32>}, {pipeline_mode = #tpu.pipeline_mode<synchronous>, transform_indices = @transform_1, window_bounds = array<i64: 32, 96>}, {pipeline_mode = #tpu.pipeline_mode<synchronous>, transform_indices = @transform_2, window_bounds = array<i64: 1, 96>}, {pipeline_mode = #tpu.pipeline_mode<synchronous>, transform_indices = @transform_3, window_bounds = array<i64: 32, 32>}, {pipeline_mode = #tpu.pipeline_mode<synchronous>, transform_indices = @transform_4, window_bounds = array<i64: 1, 32>}, {pipeline_mode = #tpu.pipeline_mode<synchronous>, transform_indices = @transform_5, window_bounds = array<i64: 32, 64>}, {pipeline_mode = #tpu.pipeline_mode<synchronous>, transform_indices = @transform_6, window_bounds = array<i64: 1, 64>}, {pipeline_mode = #tpu.pipeline_mode<synchronous>, transform_indices = @transform_7, window_bounds = array<i64: 64, 32>}, {pipeline_mode = #tpu.pipeline_mode<synchronous>, transform_indices = @transform_8, window_bounds = array<i64: 1, 32>}, {pipeline_mode = #tpu.pipeline_mode<synchronous>, transform_indices = @transform_9, window_bounds = array<i64: 1, 32>}, {pipeline_mode = #tpu.pipeline_mode<synchronous>, transform_indices = @transform_10, window_bounds = array<i64: 1, 32>}, {pipeline_mode = #tpu.pipeline_mode<synchronous>, transform_indices = @transform_11, window_bounds = array<i64: 1, 32>}, {pipeline_mode = #tpu.pipeline_mode<synchronous>, transform_indices = @transform_12, window_bounds = array<i64: 1, 32>}, {pipeline_mode = #tpu.pipeline_mode<synchronous>, transform_indices = @transform_13, window_bounds = array<i64: 1, 32>}, {pipeline_mode = #tpu.pipeline_mode<synchronous>, transform_indices = @transform_14, window_bounds = array<i64: 1, 32>}, {transform_indices = @transform_15, window_bounds = array<i64: 1, 8, 32>}]} {
    %c0_i32 = arith.constant 0 : i32
    %0 = arith.cmpi eq, %arg1, %c0_i32 : i32
    %1 = arith.extui %0 : i1 to i32
    %c0_i32_0 = arith.constant 0 : i32
    %2 = arith.cmpi ne, %1, %c0_i32_0 : i32
    scf.if %2 {
      %c0_59 = arith.constant 0 : index
      %c0_60 = arith.constant 0 : index
      %c0_61 = arith.constant 0 : index
      %150 = vector.load %arg2[%c0_59, %c0_60, %c0_61] : memref<1x8x32xf32, #tpu.memory_space<vmem>>, vector<1x8x32xf32>
      %151 = vector.shape_cast %150 : vector<1x8x32xf32> to vector<8x32xf32>
      %152 = arith.truncf %151 : vector<8x32xf32> to vector<8x32xbf16>
      %c0_62 = arith.constant 0 : index
      %c0_63 = arith.constant 0 : index
      %153 = vector.load %arg3[%c0_62, %c0_63] : memref<32x96xbf16, #tpu.memory_space<vmem>>, vector<32x96xbf16>
      %cst_64 = arith.constant dense<0.000000e+00> : vector<8x96xf32>
      %154 = tpu.matmul %152, %153, %cst_64 {dimension_numbers = #tpu.dot_dimension_numbers<[1], [0], [0], [1], [0, 0, 1, 1], [], []>} : vector<8x32xbf16>, vector<32x96xbf16>, vector<8x96xf32> -> vector<8x96xf32>
      %c0_65 = arith.constant 0 : index
      %c0_66 = arith.constant 0 : index
      %155 = vector.load %arg4[%c0_65, %c0_66] : memref<1x96xf32, #tpu.memory_space<vmem>>, vector<1x96xf32>
      %156 = vector.broadcast %155 : vector<1x96xf32> to vector<8x96xf32>
      %157 = arith.addf %154, %156 : vector<8x96xf32>
      %158 = vector.extract_strided_slice %157 {offsets = [0, 0], sizes = [8, 32], strides = [1, 1]} : vector<8x96xf32> to vector<8x32xf32>
      %cst_67 = arith.constant 0.353553385 : f32
      %159 = vector.broadcast %cst_67 : f32 to vector<8x32xf32>
      %160 = arith.mulf %158, %159 : vector<8x32xf32>
      %161 = arith.truncf %160 : vector<8x32xf32> to vector<8x32xbf16>
      %c0_68 = arith.constant 0 : index
      %c0_69 = arith.constant 0 : index
      %162 = vector.load %arg18[%c0_68, %c0_69] : memref<8x32xbf16, #tpu.memory_space<vmem>>, vector<8x32xbf16>
      tpu.vector_store %arg18[%c0_68, %c0_69], %161 {strides = array<i32>} : memref<8x32xbf16, #tpu.memory_space<vmem>>, vector<8x32xbf16>,
      %163 = vector.extract_strided_slice %157 {offsets = [0, 32], sizes = [8, 32], strides = [1, 1]} : vector<8x96xf32> to vector<8x32xf32>
      %164 = arith.truncf %163 : vector<8x32xf32> to vector<8x32xbf16>
      %c0_70 = arith.constant 0 : index
      %c0_71 = arith.constant 0 : index
      %165 = vector.load %arg19[%c0_70, %c0_71] : memref<8x32xbf16, #tpu.memory_space<vmem>>, vector<8x32xbf16>
      tpu.vector_store %arg19[%c0_70, %c0_71], %164 {strides = array<i32>} : memref<8x32xbf16, #tpu.memory_space<vmem>>, vector<8x32xbf16>,
      %166 = vector.extract_strided_slice %157 {offsets = [0, 64], sizes = [8, 32], strides = [1, 1]} : vector<8x96xf32> to vector<8x32xf32>
      %167 = arith.truncf %166 : vector<8x32xf32> to vector<8x32xbf16>
      %c0_72 = arith.constant 0 : index
      %c0_73 = arith.constant 0 : index
      %168 = vector.load %arg20[%c0_72, %c0_73] : memref<8x32xbf16, #tpu.memory_space<vmem>>, vector<8x32xbf16>
      tpu.vector_store %arg20[%c0_72, %c0_73], %167 {strides = array<i32>} : memref<8x32xbf16, #tpu.memory_space<vmem>>, vector<8x32xbf16>,
    } else {
    }
    %c8_i32 = arith.constant 8 : i32
    %3 = arith.muli %arg1, %c8_i32 : i32
    %4 = tpu.assume_multiple %3, 8 : i32
    %c0 = arith.constant 0 : index
    %5 = arith.index_cast %4 : i32 to index
    %c0_1 = arith.constant 0 : index
    %6 = vector.load %arg2[%c0, %5, %c0_1] : memref<1x8x32xf32, #tpu.memory_space<vmem>>, vector<1x8x32xf32>
    %7 = vector.shape_cast %6 : vector<1x8x32xf32> to vector<8x32xf32>
    %8 = arith.index_cast %4 : i32 to index
    %c0_2 = arith.constant 0 : index
    %9 = vector.load %arg18[%8, %c0_2] : memref<8x32xbf16, #tpu.memory_space<vmem>>, vector<8x32xbf16>
    %c0_3 = arith.constant 0 : index
    %c0_4 = arith.constant 0 : index
    %10 = vector.load %arg19[%c0_3, %c0_4] : memref<8x32xbf16, #tpu.memory_space<vmem>>, vector<8x32xbf16>
    %c0_5 = arith.constant 0 : index
    %c0_6 = arith.constant 0 : index
    %11 = vector.load %arg20[%c0_5, %c0_6] : memref<8x32xbf16, #tpu.memory_space<vmem>>, vector<8x32xbf16>
    %12 = vector.extract_strided_slice %9 {offsets = [0, 0], sizes = [8, 8], strides = [1, 1]} : vector<8x32xbf16> to vector<8x8xbf16>
    %13 = vector.extract_strided_slice %10 {offsets = [0, 0], sizes = [8, 8], strides = [1, 1]} : vector<8x32xbf16> to vector<8x8xbf16>
    %cst = arith.constant dense<0.000000e+00> : vector<8x8xf32>
    %14 = tpu.matmul %12, %13, %cst {dimension_numbers = #tpu.dot_dimension_numbers<[1], [1], [0], [0], [0, 0, 1, 0], [], []>} : vector<8x8xbf16>, vector<8x8xbf16>, vector<8x8xf32> -> vector<8x8xf32>
    %cst_7 = arith.constant dense<0xFF800000> : vector<8xf32>
    %15 = vector.multi_reduction <maximumf>, %14, %cst_7 [1] : vector<8x8xf32> to vector<8xf32>
    %16 = vector.shape_cast %15 : vector<8xf32> to vector<8x1xf32>
    %17 = vector.broadcast %16 : vector<8x1xf32> to vector<8x8xf32>
    %18 = arith.subf %14, %17 : vector<8x8xf32>
    %19 = math.exp %18 : vector<8x8xf32>
    %cst_8 = arith.constant dense<0.000000e+00> : vector<8xf32>
    %20 = vector.multi_reduction <add>, %19, %cst_8 [1] : vector<8x8xf32> to vector<8xf32>
    %21 = vector.shape_cast %20 : vector<8xf32> to vector<8x1xf32>
    %22 = tpu.reciprocal %21 {approx = true} : vector<8x1xf32> -> vector<8x1xf32>
    %23 = vector.broadcast %22 : vector<8x1xf32> to vector<8x8xf32>
    %24 = arith.mulf %19, %23 : vector<8x8xf32>
    %25 = arith.truncf %24 : vector<8x8xf32> to vector<8x8xbf16>
    %26 = vector.extract_strided_slice %11 {offsets = [0, 0], sizes = [8, 8], strides = [1, 1]} : vector<8x32xbf16> to vector<8x8xbf16>
    %cst_9 = arith.constant dense<0.000000e+00> : vector<8x8xf32>
    %27 = tpu.matmul %25, %26, %cst_9 {dimension_numbers = #tpu.dot_dimension_numbers<[1], [0], [0], [1], [0, 0, 1, 1], [], []>} : vector<8x8xbf16>, vector<8x8xbf16>, vector<8x8xf32> -> vector<8x8xf32>
    %28 = vector.extract_strided_slice %9 {offsets = [0, 8], sizes = [8, 8], strides = [1, 1]} : vector<8x32xbf16> to vector<8x8xbf16>
    %29 = vector.extract_strided_slice %10 {offsets = [0, 8], sizes = [8, 8], strides = [1, 1]} : vector<8x32xbf16> to vector<8x8xbf16>
    %cst_10 = arith.constant dense<0.000000e+00> : vector<8x8xf32>
    %30 = tpu.matmul %28, %29, %cst_10 {dimension_numbers = #tpu.dot_dimension_numbers<[1], [1], [0], [0], [0, 0, 1, 0], [], []>} : vector<8x8xbf16>, vector<8x8xbf16>, vector<8x8xf32> -> vector<8x8xf32>
    %cst_11 = arith.constant dense<0xFF800000> : vector<8xf32>
    %31 = vector.multi_reduction <maximumf>, %30, %cst_11 [1] : vector<8x8xf32> to vector<8xf32>
    %32 = vector.shape_cast %31 : vector<8xf32> to vector<8x1xf32>
    %33 = vector.broadcast %32 : vector<8x1xf32> to vector<8x8xf32>
    %34 = arith.subf %30, %33 : vector<8x8xf32>
    %35 = math.exp %34 : vector<8x8xf32>
    %cst_12 = arith.constant dense<0.000000e+00> : vector<8xf32>
    %36 = vector.multi_reduction <add>, %35, %cst_12 [1] : vector<8x8xf32> to vector<8xf32>
    %37 = vector.shape_cast %36 : vector<8xf32> to vector<8x1xf32>
    %38 = tpu.reciprocal %37 {approx = true} : vector<8x1xf32> -> vector<8x1xf32>
    %39 = vector.broadcast %38 : vector<8x1xf32> to vector<8x8xf32>
    %40 = arith.mulf %35, %39 : vector<8x8xf32>
    %41 = arith.truncf %40 : vector<8x8xf32> to vector<8x8xbf16>
    %42 = vector.extract_strided_slice %11 {offsets = [0, 8], sizes = [8, 8], strides = [1, 1]} : vector<8x32xbf16> to vector<8x8xbf16>
    %cst_13 = arith.constant dense<0.000000e+00> : vector<8x8xf32>
    %43 = tpu.matmul %41, %42, %cst_13 {dimension_numbers = #tpu.dot_dimension_numbers<[1], [0], [0], [1], [0, 0, 1, 1], [], []>} : vector<8x8xbf16>, vector<8x8xbf16>, vector<8x8xf32> -> vector<8x8xf32>
    %44 = vector.extract_strided_slice %9 {offsets = [0, 16], sizes = [8, 8], strides = [1, 1]} : vector<8x32xbf16> to vector<8x8xbf16>
    %45 = vector.extract_strided_slice %10 {offsets = [0, 16], sizes = [8, 8], strides = [1, 1]} : vector<8x32xbf16> to vector<8x8xbf16>
    %cst_14 = arith.constant dense<0.000000e+00> : vector<8x8xf32>
    %46 = tpu.matmul %44, %45, %cst_14 {dimension_numbers = #tpu.dot_dimension_numbers<[1], [1], [0], [0], [0, 0, 1, 0], [], []>} : vector<8x8xbf16>, vector<8x8xbf16>, vector<8x8xf32> -> vector<8x8xf32>
    %cst_15 = arith.constant dense<0xFF800000> : vector<8xf32>
    %47 = vector.multi_reduction <maximumf>, %46, %cst_15 [1] : vector<8x8xf32> to vector<8xf32>
    %48 = vector.shape_cast %47 : vector<8xf32> to vector<8x1xf32>
    %49 = vector.broadcast %48 : vector<8x1xf32> to vector<8x8xf32>
    %50 = arith.subf %46, %49 : vector<8x8xf32>
    %51 = math.exp %50 : vector<8x8xf32>
    %cst_16 = arith.constant dense<0.000000e+00> : vector<8xf32>
    %52 = vector.multi_reduction <add>, %51, %cst_16 [1] : vector<8x8xf32> to vector<8xf32>
    %53 = vector.shape_cast %52 : vector<8xf32> to vector<8x1xf32>
    %54 = tpu.reciprocal %53 {approx = true} : vector<8x1xf32> -> vector<8x1xf32>
    %55 = vector.broadcast %54 : vector<8x1xf32> to vector<8x8xf32>
    %56 = arith.mulf %51, %55 : vector<8x8xf32>
    %57 = arith.truncf %56 : vector<8x8xf32> to vector<8x8xbf16>
    %58 = vector.extract_strided_slice %11 {offsets = [0, 16], sizes = [8, 8], strides = [1, 1]} : vector<8x32xbf16> to vector<8x8xbf16>
    %cst_17 = arith.constant dense<0.000000e+00> : vector<8x8xf32>
    %59 = tpu.matmul %57, %58, %cst_17 {dimension_numbers = #tpu.dot_dimension_numbers<[1], [0], [0], [1], [0, 0, 1, 1], [], []>} : vector<8x8xbf16>, vector<8x8xbf16>, vector<8x8xf32> -> vector<8x8xf32>
    %60 = vector.extract_strided_slice %9 {offsets = [0, 24], sizes = [8, 8], strides = [1, 1]} : vector<8x32xbf16> to vector<8x8xbf16>
    %61 = vector.extract_strided_slice %10 {offsets = [0, 24], sizes = [8, 8], strides = [1, 1]} : vector<8x32xbf16> to vector<8x8xbf16>
    %cst_18 = arith.constant dense<0.000000e+00> : vector<8x8xf32>
    %62 = tpu.matmul %60, %61, %cst_18 {dimension_numbers = #tpu.dot_dimension_numbers<[1], [1], [0], [0], [0, 0, 1, 0], [], []>} : vector<8x8xbf16>, vector<8x8xbf16>, vector<8x8xf32> -> vector<8x8xf32>
    %cst_19 = arith.constant dense<0xFF800000> : vector<8xf32>
    %63 = vector.multi_reduction <maximumf>, %62, %cst_19 [1] : vector<8x8xf32> to vector<8xf32>
    %64 = vector.shape_cast %63 : vector<8xf32> to vector<8x1xf32>
    %65 = vector.broadcast %64 : vector<8x1xf32> to vector<8x8xf32>
    %66 = arith.subf %62, %65 : vector<8x8xf32>
    %67 = math.exp %66 : vector<8x8xf32>
    %cst_20 = arith.constant dense<0.000000e+00> : vector<8xf32>
    %68 = vector.multi_reduction <add>, %67, %cst_20 [1] : vector<8x8xf32> to vector<8xf32>
    %69 = vector.shape_cast %68 : vector<8xf32> to vector<8x1xf32>
    %70 = tpu.reciprocal %69 {approx = true} : vector<8x1xf32> -> vector<8x1xf32>
    %71 = vector.broadcast %70 : vector<8x1xf32> to vector<8x8xf32>
    %72 = arith.mulf %67, %71 : vector<8x8xf32>
    %73 = arith.truncf %72 : vector<8x8xf32> to vector<8x8xbf16>
    %74 = vector.extract_strided_slice %11 {offsets = [0, 24], sizes = [8, 8], strides = [1, 1]} : vector<8x32xbf16> to vector<8x8xbf16>
    %cst_21 = arith.constant dense<0.000000e+00> : vector<8x8xf32>
    %75 = tpu.matmul %73, %74, %cst_21 {dimension_numbers = #tpu.dot_dimension_numbers<[1], [0], [0], [1], [0, 0, 1, 1], [], []>} : vector<8x8xbf16>, vector<8x8xbf16>, vector<8x8xf32> -> vector<8x8xf32>
    %76 = tpu.concatenate %27, %43, %59, %75 in 1 : vector<8x8xf32>, vector<8x8xf32>, vector<8x8xf32>, vector<8x8xf32> -> vector<8x32xf32>
    %77 = arith.truncf %76 : vector<8x32xf32> to vector<8x32xbf16>
    %c0_22 = arith.constant 0 : index
    %c0_23 = arith.constant 0 : index
    %78 = vector.load %arg5[%c0_22, %c0_23] : memref<32x32xbf16, #tpu.memory_space<vmem>>, vector<32x32xbf16>
    %cst_24 = arith.constant dense<0.000000e+00> : vector<8x32xf32>
    %79 = tpu.matmul %77, %78, %cst_24 {dimension_numbers = #tpu.dot_dimension_numbers<[1], [0], [0], [1], [0, 0, 1, 1], [], []>} : vector<8x32xbf16>, vector<32x32xbf16>, vector<8x32xf32> -> vector<8x32xf32>
    %c0_25 = arith.constant 0 : index
    %c0_26 = arith.constant 0 : index
    %80 = vector.load %arg6[%c0_25, %c0_26] : memref<1x32xf32, #tpu.memory_space<vmem>>, vector<1x32xf32>
    %81 = vector.broadcast %80 : vector<1x32xf32> to vector<8x32xf32>
    %82 = arith.addf %79, %81 : vector<8x32xf32>
    %83 = arith.addf %7, %82 : vector<8x32xf32>
    %c0_27 = arith.constant 0 : index
    %c0_28 = arith.constant 0 : index
    %84 = vector.load %arg11[%c0_27, %c0_28] : memref<1x32xf32, #tpu.memory_space<vmem>>, vector<1x32xf32>
    %c0_29 = arith.constant 0 : index
    %c0_30 = arith.constant 0 : index
    %85 = vector.load %arg12[%c0_29, %c0_30] : memref<1x32xf32, #tpu.memory_space<vmem>>, vector<1x32xf32>
    %cst_31 = arith.constant dense<0.000000e+00> : vector<8xf32>
    %86 = vector.multi_reduction <add>, %83, %cst_31 [1] : vector<8x32xf32> to vector<8xf32>
    %87 = vector.shape_cast %86 : vector<8xf32> to vector<8x1xf32>
    %cst_32 = arith.constant 3.200000e+01 : f32
    %88 = vector.broadcast %cst_32 : f32 to vector<8x1xf32>
    %89 = arith.divf %87, %88 : vector<8x1xf32>
    %90 = vector.broadcast %89 : vector<8x1xf32> to vector<8x32xf32>
    %91 = arith.subf %83, %90 : vector<8x32xf32>
    %92 = arith.mulf %91, %91 : vector<8x32xf32>
    %cst_33 = arith.constant dense<0.000000e+00> : vector<8xf32>
    %93 = vector.multi_reduction <add>, %92, %cst_33 [1] : vector<8x32xf32> to vector<8xf32>
    %94 = vector.shape_cast %93 : vector<8xf32> to vector<8x1xf32>
    %cst_34 = arith.constant 3.200000e+01 : f32
    %95 = vector.broadcast %cst_34 : f32 to vector<8x1xf32>
    %96 = arith.divf %94, %95 : vector<8x1xf32>
    %97 = vector.broadcast %89 : vector<8x1xf32> to vector<8x32xf32>
    %98 = arith.subf %83, %97 : vector<8x32xf32>
    %cst_35 = arith.constant 9.99999974E-6 : f32
    %99 = vector.broadcast %cst_35 : f32 to vector<8x1xf32>
    %100 = arith.addf %96, %99 : vector<8x1xf32>
    %101 = math.rsqrt %100 : vector<8x1xf32>
    %102 = vector.broadcast %101 : vector<8x1xf32> to vector<8x32xf32>
    %103 = arith.mulf %98, %102 : vector<8x32xf32>
    %104 = vector.broadcast %84 : vector<1x32xf32> to vector<8x32xf32>
    %105 = arith.mulf %103, %104 : vector<8x32xf32>
    %106 = vector.broadcast %85 : vector<1x32xf32> to vector<8x32xf32>
    %107 = arith.addf %105, %106 : vector<8x32xf32>
    %108 = arith.truncf %107 : vector<8x32xf32> to vector<8x32xbf16>
    %c0_36 = arith.constant 0 : index
    %c0_37 = arith.constant 0 : index
    %109 = vector.load %arg7[%c0_36, %c0_37] : memref<32x64xbf16, #tpu.memory_space<vmem>>, vector<32x64xbf16>
    %cst_38 = arith.constant dense<0.000000e+00> : vector<8x64xf32>
    %110 = tpu.matmul %108, %109, %cst_38 {dimension_numbers = #tpu.dot_dimension_numbers<[1], [0], [0], [1], [0, 0, 1, 1], [], []>} : vector<8x32xbf16>, vector<32x64xbf16>, vector<8x64xf32> -> vector<8x64xf32>
    %c0_39 = arith.constant 0 : index
    %c0_40 = arith.constant 0 : index
    %111 = vector.load %arg8[%c0_39, %c0_40] : memref<1x64xf32, #tpu.memory_space<vmem>>, vector<1x64xf32>
    %112 = vector.broadcast %111 : vector<1x64xf32> to vector<8x64xf32>
    %113 = arith.addf %110, %112 : vector<8x64xf32>
    %cst_41 = arith.constant 0.000000e+00 : f32
    %114 = vector.broadcast %cst_41 : f32 to vector<8x64xf32>
    %115 = arith.maximumf %113, %114 : vector<8x64xf32>
    %116 = arith.truncf %115 : vector<8x64xf32> to vector<8x64xbf16>
    %c0_42 = arith.constant 0 : index
    %c0_43 = arith.constant 0 : index
    %117 = vector.load %arg9[%c0_42, %c0_43] : memref<64x32xbf16, #tpu.memory_space<vmem>>, vector<64x32xbf16>
    %cst_44 = arith.constant dense<0.000000e+00> : vector<8x32xf32>
    %118 = tpu.matmul %116, %117, %cst_44 {dimension_numbers = #tpu.dot_dimension_numbers<[1], [0], [0], [1], [0, 0, 1, 1], [], []>} : vector<8x64xbf16>, vector<64x32xbf16>, vector<8x32xf32> -> vector<8x32xf32>
    %c0_45 = arith.constant 0 : index
    %c0_46 = arith.constant 0 : index
    %119 = vector.load %arg10[%c0_45, %c0_46] : memref<1x32xf32, #tpu.memory_space<vmem>>, vector<1x32xf32>
    %120 = vector.broadcast %119 : vector<1x32xf32> to vector<8x32xf32>
    %121 = arith.addf %118, %120 : vector<8x32xf32>
    %122 = arith.addf %107, %121 : vector<8x32xf32>
    %c0_47 = arith.constant 0 : index
    %c0_48 = arith.constant 0 : index
    %123 = vector.load %arg13[%c0_47, %c0_48] : memref<1x32xf32, #tpu.memory_space<vmem>>, vector<1x32xf32>
    %c0_49 = arith.constant 0 : index
    %c0_50 = arith.constant 0 : index
    %124 = vector.load %arg14[%c0_49, %c0_50] : memref<1x32xf32, #tpu.memory_space<vmem>>, vector<1x32xf32>
    %cst_51 = arith.constant dense<0.000000e+00> : vector<8xf32>
    %125 = vector.multi_reduction <add>, %122, %cst_51 [1] : vector<8x32xf32> to vector<8xf32>
    %126 = vector.shape_cast %125 : vector<8xf32> to vector<8x1xf32>
    %cst_52 = arith.constant 3.200000e+01 : f32
    %127 = vector.broadcast %cst_52 : f32 to vector<8x1xf32>
    %128 = arith.divf %126, %127 : vector<8x1xf32>
    %129 = vector.broadcast %128 : vector<8x1xf32> to vector<8x32xf32>
    %130 = arith.subf %122, %129 : vector<8x32xf32>
    %131 = arith.mulf %130, %130 : vector<8x32xf32>
    %cst_53 = arith.constant dense<0.000000e+00> : vector<8xf32>
    %132 = vector.multi_reduction <add>, %131, %cst_53 [1] : vector<8x32xf32> to vector<8xf32>
    %133 = vector.shape_cast %132 : vector<8xf32> to vector<8x1xf32>
    %cst_54 = arith.constant 3.200000e+01 : f32
    %134 = vector.broadcast %cst_54 : f32 to vector<8x1xf32>
    %135 = arith.divf %133, %134 : vector<8x1xf32>
    %136 = vector.broadcast %128 : vector<8x1xf32> to vector<8x32xf32>
    %137 = arith.subf %122, %136 : vector<8x32xf32>
    %cst_55 = arith.constant 9.99999974E-6 : f32
    %138 = vector.broadcast %cst_55 : f32 to vector<8x1xf32>
    %139 = arith.addf %135, %138 : vector<8x1xf32>
    %140 = math.rsqrt %139 : vector<8x1xf32>
    %141 = vector.broadcast %140 : vector<8x1xf32> to vector<8x32xf32>
    %142 = arith.mulf %137, %141 : vector<8x32xf32>
    %143 = vector.broadcast %123 : vector<1x32xf32> to vector<8x32xf32>
    %144 = arith.mulf %142, %143 : vector<8x32xf32>
    %145 = vector.broadcast %124 : vector<1x32xf32> to vector<8x32xf32>
    %146 = arith.addf %144, %145 : vector<8x32xf32>
    %c0_56 = arith.constant 0 : index
    %c0_57 = arith.constant 0 : index
    %c0_58 = arith.constant 0 : index
    %147 = vector.load %arg17[%c0_56, %c0_57, %c0_58] : memref<1x8x32xf32, #tpu.memory_space<vmem>>, vector<1x8x32xf32>
    %148 = vector.shape_cast %147 : vector<1x8x32xf32> to vector<8x32xf32>
    %149 = vector.shape_cast %146 : vector<8x32xf32> to vector<1x8x32xf32>
    tpu.vector_store %arg17[%c0_56, %c0_57, %c0_58], %149 {strides = array<i32>} : memref<1x8x32xf32, #tpu.memory_space<vmem>>, vector<1x8x32xf32>,
    return
  }
  func.func @transform_0(%arg0: i32, %arg1: i32) -> (i32, i32, i32) {
    %c0_i32 = arith.constant 0 : i32
    %c0_i32_0 = arith.constant 0 : i32
    %c0_i32_1 = arith.constant 0 : i32
    return %arg0, %c0_i32, %c0_i32_0 : i32, i32, i32
  }
  func.func @transform_1(%arg0: i32, %arg1: i32) -> (i32, i32) {
    %c0_i32 = arith.constant 0 : i32
    %c0_i32_0 = arith.constant 0 : i32
    %c0_i32_1 = arith.constant 0 : i32
    return %c0_i32, %c0_i32_0 : i32, i32
  }
  func.func @transform_2(%arg0: i32, %arg1: i32) -> (i32, i32) {
    %c0_i32 = arith.constant 0 : i32
    %c0_i32_0 = arith.constant 0 : i32
    %c0_i32_1 = arith.constant 0 : i32
    return %c0_i32, %c0_i32_0 : i32, i32
  }
  func.func @transform_3(%arg0: i32, %arg1: i32) -> (i32, i32) {
    %c0_i32 = arith.constant 0 : i32
    %c0_i32_0 = arith.constant 0 : i32
    %c0_i32_1 = arith.constant 0 : i32
    return %c0_i32, %c0_i32_0 : i32, i32
  }
  func.func @transform_4(%arg0: i32, %arg1: i32) -> (i32, i32) {
    %c0_i32 = arith.constant 0 : i32
    %c0_i32_0 = arith.constant 0 : i32
    %c0_i32_1 = arith.constant 0 : i32
    return %c0_i32, %c0_i32_0 : i32, i32
  }
  func.func @transform_5(%arg0: i32, %arg1: i32) -> (i32, i32) {
    %c0_i32 = arith.constant 0 : i32
    %c0_i32_0 = arith.constant 0 : i32
    %c0_i32_1 = arith.constant 0 : i32
    return %c0_i32, %c0_i32_0 : i32, i32
  }
  func.func @transform_6(%arg0: i32, %arg1: i32) -> (i32, i32) {
    %c0_i32 = arith.constant 0 : i32
    %c0_i32_0 = arith.constant 0 : i32
    %c0_i32_1 = arith.constant 0 : i32
    return %c0_i32, %c0_i32_0 : i32, i32
  }
  func.func @transform_7(%arg0: i32, %arg1: i32) -> (i32, i32) {
    %c0_i32 = arith.constant 0 : i32
    %c0_i32_0 = arith.constant 0 : i32
    %c0_i32_1 = arith.constant 0 : i32
    return %c0_i32, %c0_i32_0 : i32, i32
  }
  func.func @transform_8(%arg0: i32, %arg1: i32) -> (i32, i32) {
    %c0_i32 = arith.constant 0 : i32
    %c0_i32_0 = arith.constant 0 : i32
    %c0_i32_1 = arith.constant 0 : i32
    return %c0_i32, %c0_i32_0 : i32, i32
  }
  func.func @transform_9(%arg0: i32, %arg1: i32) -> (i32, i32) {
    %c0_i32 = arith.constant 0 : i32
    %c0_i32_0 = arith.constant 0 : i32
    %c0_i32_1 = arith.constant 0 : i32
    return %c0_i32, %c0_i32_0 : i32, i32
  }
  func.func @transform_10(%arg0: i32, %arg1: i32) -> (i32, i32) {
    %c0_i32 = arith.constant 0 : i32
    %c0_i32_0 = arith.constant 0 : i32
    %c0_i32_1 = arith.constant 0 : i32
    return %c0_i32, %c0_i32_0 : i32, i32
  }
  func.func @transform_11(%arg0: i32, %arg1: i32) -> (i32, i32) {
    %c0_i32 = arith.constant 0 : i32
    %c0_i32_0 = arith.constant 0 : i32
    %c0_i32_1 = arith.constant 0 : i32
    return %c0_i32, %c0_i32_0 : i32, i32
  }
  func.func @transform_12(%arg0: i32, %arg1: i32) -> (i32, i32) {
    %c0_i32 = arith.constant 0 : i32
    %c0_i32_0 = arith.constant 0 : i32
    %c0_i32_1 = arith.constant 0 : i32
    return %c0_i32, %c0_i32_0 : i32, i32
  }
  func.func @transform_13(%arg0: i32, %arg1: i32) -> (i32, i32) {
    %c0_i32 = arith.constant 0 : i32
    %c0_i32_0 = arith.constant 0 : i32
    %c0_i32_1 = arith.constant 0 : i32
    return %c0_i32, %c0_i32_0 : i32, i32
  }
  func.func @transform_14(%arg0: i32, %arg1: i32) -> (i32, i32) {
    %c0_i32 = arith.constant 0 : i32
    %c0_i32_0 = arith.constant 0 : i32
    %c0_i32_1 = arith.constant 0 : i32
    return %c0_i32, %c0_i32_0 : i32, i32
  }
  func.func @transform_15(%arg0: i32, %arg1: i32) -> (i32, i32, i32) {
    %c0_i32 = arith.constant 0 : i32
    %c0_i32_0 = arith.constant 0 : i32
    return %arg0, %arg1, %c0_i32 : i32, i32, i32
  }
}

</mosaic_0001>

<llo_original>
// kernel: tpu_custom_call.1
$region0: #{tpu_custom_call.1}
  #allocation0 [shape = 'u32[]', space=smem, size = 0x4, offset = 0x4, fixed_abs, tag = 'smem constant byte address 0x4 - core index']
  #allocation1 [shape = 'u32[144,128]{1,0:T(1,128)}', space=vmem, size = 0x12000, scoped, tag = 'internal scratch']
  #allocation2 [shape = 'bf16[8,32]{1,0:T(8,128)(2,1)}', space=vmem, size = 0x800, scoped, tag = 'scratch operand']
  #allocation3 [shape = 'bf16[8,32]{1,0:T(8,128)(2,1)}', space=vmem, size = 0x800, scoped, tag = 'scratch operand']
  #allocation4 [shape = 'bf16[8,32]{1,0:T(8,128)(2,1)}', space=vmem, size = 0x800, scoped, tag = 'scratch operand']
  %s0 = inlined_call_operand.vmem [shape: f32[2,8,32], index: 0, kind: input, shape index: {}]
  %s1 = inlined_call_operand.vmem [shape: bf16[32,96], index: 1, kind: input, shape index: {}]
  %s2 = inlined_call_operand.vmem [shape: f32[1,96], index: 2, kind: input, shape index: {}]
  %s3 = inlined_call_operand.vmem [shape: bf16[32,32], index: 3, kind: input, shape index: {}]
  %s4 = inlined_call_operand.vmem [shape: f32[1,32], index: 4, kind: input, shape index: {}]
  %s5 = inlined_call_operand.hbm [shape: bf16[32,64], index: 5, kind: input, shape index: {}]
  %s6 = inlined_call_operand.vmem [shape: f32[1,64], index: 6, kind: input, shape index: {}]
  %s7 = inlined_call_operand.vmem [shape: bf16[64,32], index: 7, kind: input, shape index: {}]
  %s8 = inlined_call_operand.vmem [shape: f32[1,32], index: 8, kind: input, shape index: {}]
  %s9 = inlined_call_operand.vmem [shape: f32[1,32], index: 9, kind: input, shape index: {}]
  %s10 = inlined_call_operand.vmem [shape: f32[1,32], index: 10, kind: input, shape index: {}]
  %s11 = inlined_call_operand.vmem [shape: f32[1,32], index: 11, kind: input, shape index: {}]
  %s12 = inlined_call_operand.vmem [shape: f32[1,32], index: 12, kind: input, shape index: {}]
  %s13 = inlined_call_operand.vmem [shape: f32[1,32], index: 13, kind: input, shape index: {}]
  %s14 = inlined_call_operand.vmem [shape: f32[1,32], index: 14, kind: input, shape index: {}]
  %s15 = inlined_call_operand.hbm [shape: f32[2,8,32], index: 15, kind: output, shape index: {}]
  %s16 = sld [smem:[#allocation0]]
  $region101: #{tpu_custom_call.1} parent=0
    _
  %s18 = ssub.s32 1, %s16
  %s19 = scalar_select 0, %s18, %s16
  $region1: #{tpu_custom_call.1} parent=0
    #allocation5 [shape = 'u8[8192]{0}', space=vmem, size = 0x2000, scoped, tag = 'input window, operand 5, single buffered']
    #allocation6 [shape = 's32[2]{0}', space=sflag, size = 0x8, scoped, tag = 'scoped memory for tpu_custom_call.1']
    #allocation7 [shape = 's32[2]{0}', space=sflag, size = 0x8, scoped, tag = 'scoped memory for tpu_custom_call.1']
    #allocation8 [shape = 'u8[8192]{0}', space=vmem, size = 0x2000, scoped, tag = 'output window, operand 0']
    %20 = vsyncpa [#allocation6], 0
    %21 = vsyncpa [#allocation7], 0
    %s22 = scalar_lea.sflag [#allocation7], 1
    %23 = vsyncpa %s22, 0
    loop: start=0, step=1, limit=4
    $region2: #{tpu_custom_call.1} parent=1 // loop_pre_header
      _
    $region3: #{tpu_custom_call.1} parent=1 // loop_header
      %s25 = sphi 0, %s29
      %p26 = scmp.ge.s32.totalorder %s25, 4
      %s32 = sphi 0, %s44
      %s33 = sphi 0, %s40
      %s34 = sphi 0, %s32
      %s35 = sphi 0, %s33
      %s36 = sphi 0, %s34
      %s37 = sphi 0, %s35
      %s47 = sphi 0, %s49
      %s50 = sphi 0, %s47
      %s51 = sphi 0, %s50
      %s67 = sphi 0, %s51
      %s71 = sphi 0, %s71
      %s73 = sphi 0, %s71
      %s74 = sphi 0, %s73
      %s88 = sphi 0, %s74
      %s92 = sphi 0, %s92
      %s94 = sphi 0, %s92
      %s95 = sphi 0, %s94
      %s109 = sphi 0, %s95
      %s113 = sphi 0, %s113
      %s115 = sphi 0, %s113
      %s116 = sphi 0, %s115
      %s130 = sphi 0, %s116
      %s134 = sphi 0, %s134
      %s136 = sphi 0, %s134
      %s137 = sphi 0, %s136
      %s151 = sphi 0, %s137
      %s155 = sphi 0, %s155
      %s157 = sphi 0, %s155
      %s158 = sphi 0, %s157
      %s172 = sphi 0, %s158
      %s176 = sphi 0, %s176
      %s178 = sphi 0, %s176
      %s179 = sphi 0, %s178
      %s193 = sphi 0, %s179
      %s197 = sphi 0, %s197
      %s199 = sphi 0, %s197
      %s200 = sphi 0, %s199
      %s214 = sphi 0, %s200
      %s218 = sphi 0, %s218
      %s220 = sphi 0, %s218
      %s221 = sphi 0, %s220
      %s235 = sphi 0, %s221
      %s239 = sphi 0, %s239
      %s241 = sphi 0, %s239
      %s242 = sphi 0, %s241
      %s256 = sphi 0, %s242
      %s260 = sphi 0, %s260
      %s262 = sphi 0, %s260
      %s263 = sphi 0, %s262
      %s277 = sphi 0, %s263
      %s281 = sphi 0, %s281
      %s283 = sphi 0, %s281
      %s284 = sphi 0, %s283
      %s298 = sphi 0, %s284
      %s302 = sphi 0, %s302
      %s304 = sphi 0, %s302
      %s305 = sphi 0, %s304
      %s319 = sphi 0, %s305
      %s323 = sphi 0, %s323
      %s325 = sphi 0, %s323
      %s326 = sphi 0, %s325
      %s340 = sphi 0, %s326
      %s344 = sphi 0, %s344
      %s346 = sphi 0, %s344
      %s347 = sphi 0, %s346
      %s361 = sphi 0, %s347
      %s369 = sphi 0, %s371
      %s372 = sphi 0, %s369
      %s373 = sphi 0, %s372
      %s389 = sphi 0, %s373
    $region4: #{tpu_custom_call.1} parent=1 // loop_header_branch
      %28 = sbr.rel (%p26) target = $region8
    $region5: #{tpu_custom_call.1} parent=1 // loop_body
      %s30 = ssub.s32 %s25, 1
      %s31 = ssub.s32 %s25, 2
      %s38 = sadd.s32 1, %s33
      %p39 = scmp.ge.s32.totalorder %s38, 1
      %s40 = scalar_select %p39, 0, %s38
      %s41 = sadd.s32 1, %s32
      %s42 = scalar_select %p39, %s41, %s32
      %p43 = scmp.ge.s32.totalorder %s42, 2
      %s44 = scalar_select %p43, 0, %s42
      %s45 = ssub.s32 %s32, %s44
      %p46 = scmp.eq.s32.totalorder %s45, 0
      %s48 = sadd.s32 %s47, 1
      %s49 = scalar_select %p46, %s47, %s48
      %p52 = pneg %p46
      %p53 = scmp.eq.s32.totalorder %s25, 1
      %p54 = por %p52, %p53
      %p55 = scmp.ne.s32.totalorder %s47, %s50
      %p56 = scmp.eq.s32.totalorder %s25, 0
      %p57 = por %p55, %p56
      %p58 = scmp.ne.s32.totalorder %s47, %s50
      %p59 = scmp.eq.s32.totalorder %s30, 1
      %p60 = por %p58, %p59
      %p61 = scmp.ne.s32.totalorder %s50, %s51
      %p62 = scmp.eq.s32.totalorder %s30, 0
      %p63 = por %p61, %p62
      %p64 = scmp.ne.s32.totalorder %s50, %s51
      %p65 = scmp.eq.s32.totalorder %s31, 1
      %p66 = por %p64, %p65
      %p68 = scmp.ne.s32.totalorder %s51, %s67
      %p69 = scmp.eq.s32.totalorder %s31, 0
      %p70 = por %p68, %p69
      %s72 = sadd.s32 %s71, 1
      %p75 = scmp.eq.s32.totalorder %s25, 1
      %p76 = scmp.ne.s32.totalorder %s71, %s73
      %p77 = scmp.eq.s32.totalorder %s25, 0
      %p78 = por %p76, %p77
      %p79 = scmp.ne.s32.totalorder %s71, %s73
      %p80 = scmp.eq.s32.totalorder %s30, 1
      %p81 = por %p79, %p80
      %p82 = scmp.ne.s32.totalorder %s73, %s74
      %p83 = scmp.eq.s32.totalorder %s30, 0
      %p84 = por %p82, %p83
      %p85 = scmp.ne.s32.totalorder %s73, %s74
      %p86 = scmp.eq.s32.totalorder %s31, 1
      %p87 = por %p85, %p86
      %p89 = scmp.ne.s32.totalorder %s74, %s88
      %p90 = scmp.eq.s32.totalorder %s31, 0
      %p91 = por %p89, %p90
      %s93 = sadd.s32 %s92, 1
      %p96 = scmp.eq.s32.totalorder %s25, 1
      %p97 = scmp.ne.s32.totalorder %s92, %s94
      %p98 = scmp.eq.s32.totalorder %s25, 0
      %p99 = por %p97, %p98
      %p100 = scmp.ne.s32.totalorder %s92, %s94
      %p101 = scmp.eq.s32.totalorder %s30, 1
      %p102 = por %p100, %p101
      %p103 = scmp.ne.s32.totalorder %s94, %s95
      %p104 = scmp.eq.s32.totalorder %s30, 0
      %p105 = por %p103, %p104
      %p106 = scmp.ne.s32.totalorder %s94, %s95
      %p107 = scmp.eq.s32.totalorder %s31, 1
      %p108 = por %p106, %p107
      %p110 = scmp.ne.s32.totalorder %s95, %s109
      %p111 = scmp.eq.s32.totalorder %s31, 0
      %p112 = por %p110, %p111
      %s114 = sadd.s32 %s113, 1
      %p117 = scmp.eq.s32.totalorder %s25, 1
      %p118 = scmp.ne.s32.totalorder %s113, %s115
      %p119 = scmp.eq.s32.totalorder %s25, 0
      %p120 = por %p118, %p119
      %p121 = scmp.ne.s32.totalorder %s113, %s115
      %p122 = scmp.eq.s32.totalorder %s30, 1
      %p123 = por %p121, %p122
      %p124 = scmp.ne.s32.totalorder %s115, %s116
      %p125 = scmp.eq.s32.totalorder %s30, 0
      %p126 = por %p124, %p125
      %p127 = scmp.ne.s32.totalorder %s115, %s116
      %p128 = scmp.eq.s32.totalorder %s31, 1
      %p129 = por %p127, %p128
      %p131 = scmp.ne.s32.totalorder %s116, %s130
      %p132 = scmp.eq.s32.totalorder %s31, 0
      %p133 = por %p131, %p132
      %s135 = sadd.s32 %s134, 1
      %p138 = scmp.eq.s32.totalorder %s25, 1
      %p139 = scmp.ne.s32.totalorder %s134, %s136
      %p140 = scmp.eq.s32.totalorder %s25, 0
      %p141 = por %p139, %p140
      %p142 = scmp.ne.s32.totalorder %s134, %s136
      %p143 = scmp.eq.s32.totalorder %s30, 1
      %p144 = por %p142, %p143
      %p145 = scmp.ne.s32.totalorder %s136, %s137
      %p146 = scmp.eq.s32.totalorder %s30, 0
      %p147 = por %p145, %p146
      %p148 = scmp.ne.s32.totalorder %s136, %s137
      %p149 = scmp.eq.s32.totalorder %s31, 1
      %p150 = por %p148, %p149
      %p152 = scmp.ne.s32.totalorder %s137, %s151
      %p153 = scmp.eq.s32.totalorder %s31, 0
      %p154 = por %p152, %p153
      %s156 = sadd.s32 %s155, 1
      %p159 = scmp.eq.s32.totalorder %s25, 1
      %p160 = scmp.ne.s32.totalorder %s155, %s157
      %p161 = scmp.eq.s32.totalorder %s25, 0
      %p162 = por %p160, %p161
      %p163 = scmp.ne.s32.totalorder %s155, %s157
      %p164 = scmp.eq.s32.totalorder %s30, 1
      %p165 = por %p163, %p164
      %p166 = scmp.ne.s32.totalorder %s157, %s158
      %p167 = scmp.eq.s32.totalorder %s30, 0
      %p168 = por %p166, %p167
      %p169 = scmp.ne.s32.totalorder %s157, %s158
      %p170 = scmp.eq.s32.totalorder %s31, 1
      %p171 = por %p169, %p170
      %p173 = scmp.ne.s32.totalorder %s158, %s172
      %p174 = scmp.eq.s32.totalorder %s31, 0
      %p175 = por %p173, %p174
      %s177 = sadd.s32 %s176, 1
      %p180 = scmp.eq.s32.totalorder %s25, 1
      %p181 = scmp.ne.s32.totalorder %s176, %s178
      %p182 = scmp.eq.s32.totalorder %s25, 0
      %p183 = por %p181, %p182
      %p184 = scmp.ne.s32.totalorder %s176, %s178
      %p185 = scmp.eq.s32.totalorder %s30, 1
      %p186 = por %p184, %p185
      %p187 = scmp.ne.s32.totalorder %s178, %s179
      %p188 = scmp.eq.s32.totalorder %s30, 0
      %p189 = por %p187, %p188
      %p190 = scmp.ne.s32.totalorder %s178, %s179
      %p191 = scmp.eq.s32.totalorder %s31, 1
      %p192 = por %p190, %p191
      %p194 = scmp.ne.s32.totalorder %s179, %s193
      %p195 = scmp.eq.s32.totalorder %s31, 0
      %p196 = por %p194, %p195
      %s198 = sadd.s32 %s197, 1
      %p201 = scmp.eq.s32.totalorder %s25, 1
      %p202 = scmp.ne.s32.totalorder %s197, %s199
      %p203 = scmp.eq.s32.totalorder %s25, 0
      %p204 = por %p202, %p203
      %p205 = scmp.ne.s32.totalorder %s197, %s199
      %p206 = scmp.eq.s32.totalorder %s30, 1
      %p207 = por %p205, %p206
      %p208 = scmp.ne.s32.totalorder %s199, %s200
      %p209 = scmp.eq.s32.totalorder %s30, 0
      %p210 = por %p208, %p209
      %p211 = scmp.ne.s32.totalorder %s199, %s200
      %p212 = scmp.eq.s32.totalorder %s31, 1
      %p213 = por %p211, %p212
      %p215 = scmp.ne.s32.totalorder %s200, %s214
      %p216 = scmp.eq.s32.totalorder %s31, 0
      %p217 = por %p215, %p216
      %s219 = sadd.s32 %s218, 1
      %p222 = scmp.eq.s32.totalorder %s25, 1
      %p223 = scmp.ne.s32.totalorder %s218, %s220
      %p224 = scmp.eq.s32.totalorder %s25, 0
      %p225 = por %p223, %p224
      %p226 = scmp.ne.s32.totalorder %s218, %s220
      %p227 = scmp.eq.s32.totalorder %s30, 1
      %p228 = por %p226, %p227
      %p229 = scmp.ne.s32.totalorder %s220, %s221
      %p230 = scmp.eq.s32.totalorder %s30, 0
      %p231 = por %p229, %p230
      %p232 = scmp.ne.s32.totalorder %s220, %s221
      %p233 = scmp.eq.s32.totalorder %s31, 1
      %p234 = por %p232, %p233
      %p236 = scmp.ne.s32.totalorder %s221, %s235
      %p237 = scmp.eq.s32.totalorder %s31, 0
      %p238 = por %p236, %p237
      %s240 = sadd.s32 %s239, 1
      %p243 = scmp.eq.s32.totalorder %s25, 1
      %p244 = scmp.ne.s32.totalorder %s239, %s241
      %p245 = scmp.eq.s32.totalorder %s25, 0
      %p246 = por %p244, %p245
      %p247 = scmp.ne.s32.totalorder %s239, %s241
      %p248 = scmp.eq.s32.totalorder %s30, 1
      %p249 = por %p247, %p248
      %p250 = scmp.ne.s32.totalorder %s241, %s242
      %p251 = scmp.eq.s32.totalorder %s30, 0
      %p252 = por %p250, %p251
      %p253 = scmp.ne.s32.totalorder %s241, %s242
      %p254 = scmp.eq.s32.totalorder %s31, 1
      %p255 = por %p253, %p254
      %p257 = scmp.ne.s32.totalorder %s242, %s256
      %p258 = scmp.eq.s32.totalorder %s31, 0
      %p259 = por %p257, %p258
      %s261 = sadd.s32 %s260, 1
      %p264 = scmp.eq.s32.totalorder %s25, 1
      %p265 = scmp.ne.s32.totalorder %s260, %s262
      %p266 = scmp.eq.s32.totalorder %s25, 0
      %p267 = por %p265, %p266
      %p268 = scmp.ne.s32.totalorder %s260, %s262
      %p269 = scmp.eq.s32.totalorder %s30, 1
      %p270 = por %p268, %p269
      %p271 = scmp.ne.s32.totalorder %s262, %s263
      %p272 = scmp.eq.s32.totalorder %s30, 0
      %p273 = por %p271, %p272
      %p274 = scmp.ne.s32.totalorder %s262, %s263
      %p275 = scmp.eq.s32.totalorder %s31, 1
      %p276 = por %p274, %p275
      %p278 = scmp.ne.s32.totalorder %s263, %s277
      %p279 = scmp.eq.s32.totalorder %s31, 0
      %p280 = por %p278, %p279
      %s282 = sadd.s32 %s281, 1
      %p285 = scmp.eq.s32.totalorder %s25, 1
      %p286 = scmp.ne.s32.totalorder %s281, %s283
      %p287 = scmp.eq.s32.totalorder %s25, 0
      %p288 = por %p286, %p287
      %p289 = scmp.ne.s32.totalorder %s281, %s283
      %p290 = scmp.eq.s32.totalorder %s30, 1
      %p291 = por %p289, %p290
      %p292 = scmp.ne.s32.totalorder %s283, %s284
      %p293 = scmp.eq.s32.totalorder %s30, 0
      %p294 = por %p292, %p293
      %p295 = scmp.ne.s32.totalorder %s283, %s284
      %p296 = scmp.eq.s32.totalorder %s31, 1
      %p297 = por %p295, %p296
      %p299 = scmp.ne.s32.totalorder %s284, %s298
      %p300 = scmp.eq.s32.totalorder %s31, 0
      %p301 = por %p299, %p300
      %s303 = sadd.s32 %s302, 1
      %p306 = scmp.eq.s32.totalorder %s25, 1
      %p307 = scmp.ne.s32.totalorder %s302, %s304
      %p308 = scmp.eq.s32.totalorder %s25, 0
      %p309 = por %p307, %p308
      %p310 = scmp.ne.s32.totalorder %s302, %s304
      %p311 = scmp.eq.s32.totalorder %s30, 1
      %p312 = por %p310, %p311
      %p313 = scmp.ne.s32.totalorder %s304, %s305
      %p314 = scmp.eq.s32.totalorder %s30, 0
      %p315 = por %p313, %p314
      %p316 = scmp.ne.s32.totalorder %s304, %s305
      %p317 = scmp.eq.s32.totalorder %s31, 1
      %p318 = por %p316, %p317
      %p320 = scmp.ne.s32.totalorder %s305, %s319
      %p321 = scmp.eq.s32.totalorder %s31, 0
      %p322 = por %p320, %p321
      %s324 = sadd.s32 %s323, 1
      %p327 = scmp.eq.s32.totalorder %s25, 1
      %p328 = scmp.ne.s32.totalorder %s323, %s325
      %p329 = scmp.eq.s32.totalorder %s25, 0
      %p330 = por %p328, %p329
      %p331 = scmp.ne.s32.totalorder %s323, %s325
      %p332 = scmp.eq.s32.totalorder %s30, 1
      %p333 = por %p331, %p332
      %p334 = scmp.ne.s32.totalorder %s325, %s326
      %p335 = scmp.eq.s32.totalorder %s30, 0
      %p336 = por %p334, %p335
      %p337 = scmp.ne.s32.totalorder %s325, %s326
      %p338 = scmp.eq.s32.totalorder %s31, 1
      %p339 = por %p337, %p338
      %p341 = scmp.ne.s32.totalorder %s326, %s340
      %p342 = scmp.eq.s32.totalorder %s31, 0
      %p343 = por %p341, %p342
      %s345 = sadd.s32 %s344, 1
      %p348 = scmp.eq.s32.totalorder %s25, 1
      %p349 = scmp.ne.s32.totalorder %s344, %s346
      %p350 = scmp.eq.s32.totalorder %s25, 0
      %p351 = por %p349, %p350
      %p352 = scmp.ne.s32.totalorder %s344, %s346
      %p353 = scmp.eq.s32.totalorder %s30, 1
      %p354 = por %p352, %p353
      %p355 = scmp.ne.s32.totalorder %s346, %s347
      %p356 = scmp.eq.s32.totalorder %s30, 0
      %p357 = por %p355, %p356
      %p358 = scmp.ne.s32.totalorder %s346, %s347
      %p359 = scmp.eq.s32.totalorder %s31, 1
      %p360 = por %p358, %p359
      %p362 = scmp.ne.s32.totalorder %s347, %s361
      %p363 = scmp.eq.s32.totalorder %s31, 0
      %p364 = por %p362, %p363
      %s365 = ssub.s32 %s32, %s44
      %s366 = ssub.s32 %s33, %s40
      %s367 = sor.u32 %s365, %s366
      %p368 = scmp.eq.s32.totalorder %s367, 0
      %s370 = sadd.s32 %s369, 1
      %s371 = scalar_select %p368, %s369, %s370
      %p374 = pneg %p368
      %p375 = scmp.eq.s32.totalorder %s25, 1
      %p376 = por %p374, %p375
      %p377 = scmp.ne.s32.totalorder %s369, %s372
      %p378 = scmp.eq.s32.totalorder %s25, 0
      %p379 = por %p377, %p378
      %p380 = scmp.ne.s32.totalorder %s369, %s372
      %p381 = scmp.eq.s32.totalorder %s30, 1
      %p382 = por %p380, %p381
      %p383 = scmp.ne.s32.totalorder %s372, %s373
      %p384 = scmp.eq.s32.totalorder %s30, 0
      %p385 = por %p383, %p384
      %p386 = scmp.ne.s32.totalorder %s372, %s373
      %p387 = scmp.eq.s32.totalorder %s31, 1
      %p388 = por %p386, %p387
      %p390 = scmp.ne.s32.totalorder %s373, %s389
      %p391 = scmp.eq.s32.totalorder %s31, 0
      %p392 = por %p390, %p391
      %p393 = scmp.le.s32.totalorder 1, %s25
      %p394 = scmp.lt.s32.totalorder %s25, 3
      %p395 = pnand %p393, %p394
      %p396 = pneg %p395
      // Predicated region
      $region9: #{tpu_custom_call.1} parent=5 // pred_check
        _
      $region10: #{tpu_custom_call.1} parent=5 // pred_check_branch
        %398 = sbr.rel (%p395) target = $region12
      $region11: #{tpu_custom_call.1} parent=5 // pred_region
        %s399 = ssub.s32 %s25, 1
        // Predicated region
        $region13: #{tpu_custom_call.1} parent=11 // pred_check
          %p400 = pneg %p84
        $region14: #{tpu_custom_call.1} parent=11 // pred_check_branch
          %402 = sbr.rel (%p400) target = $region16
        $region15: #{tpu_custom_call.1} parent=11 // pred_region
          _
        $region16: #{tpu_custom_call.1} parent=11 // pred_fallthru
          _
        // Predicated region
        $region17: #{tpu_custom_call.1} parent=11 // pred_check
          %p403 = pneg %p105
        $region18: #{tpu_custom_call.1} parent=11 // pred_check_branch
          %405 = sbr.rel (%p403) target = $region20
        $region19: #{tpu_custom_call.1} parent=11 // pred_region
          _
        $region20: #{tpu_custom_call.1} parent=11 // pred_fallthru
          _
        // Predicated region
        $region21: #{tpu_custom_call.1} parent=11 // pred_check
          %p406 = pneg %p126
        $region22: #{tpu_custom_call.1} parent=11 // pred_check_branch
          %408 = sbr.rel (%p406) target = $region24
        $region23: #{tpu_custom_call.1} parent=11 // pred_region
          _
        $region24: #{tpu_custom_call.1} parent=11 // pred_fallthru
          _
        // Predicated region
        $region25: #{tpu_custom_call.1} parent=11 // pred_check
          %p409 = pneg %p147
        $region26: #{tpu_custom_call.1} parent=11 // pred_check_branch
          %411 = sbr.rel (%p409) target = $region28
        $region27: #{tpu_custom_call.1} parent=11 // pred_region
          _
        $region28: #{tpu_custom_call.1} parent=11 // pred_fallthru
          _
        // Predicated region
        $region29: #{tpu_custom_call.1} parent=11 // pred_check
          %p412 = pneg %p168
        $region30: #{tpu_custom_call.1} parent=11 // pred_check_branch
          %414 = sbr.rel (%p412) target = $region32
        $region31: #{tpu_custom_call.1} parent=11 // pred_region
          %s416 = ssub.s32 256, 256
          %417 = vsyncadd [#allocation6], %s416
          %s418 = sshll.u32 [#allocation5], 4
          %s419 = int_to_ptr.vmem [resolvable:$true] %s418
          %424 = dma.hbm_to_vmem [thread:$0]  %s5, 256, %s419, [#allocation6], 64, 64, 4
        $region32: #{tpu_custom_call.1} parent=11 // pred_fallthru
          _
        // Predicated region
        $region33: #{tpu_custom_call.1} parent=11 // pred_check
          %p425 = pneg %p189
        $region34: #{tpu_custom_call.1} parent=11 // pred_check_branch
          %427 = sbr.rel (%p425) target = $region36
        $region35: #{tpu_custom_call.1} parent=11 // pred_region
          _
        $region36: #{tpu_custom_call.1} parent=11 // pred_fallthru
          _
        // Predicated region
        $region37: #{tpu_custom_call.1} parent=11 // pred_check
          %p428 = pneg %p210
        $region38: #{tpu_custom_call.1} parent=11 // pred_check_branch
          %430 = sbr.rel (%p428) target = $region40
        $region39: #{tpu_custom_call.1} parent=11 // pred_region
          _
        $region40: #{tpu_custom_call.1} parent=11 // pred_fallthru
          _
        // Predicated region
        $region41: #{tpu_custom_call.1} parent=11 // pred_check
          %p431 = pneg %p231
        $region42: #{tpu_custom_call.1} parent=11 // pred_check_branch
          %433 = sbr.rel (%p431) target = $region44
        $region43: #{tpu_custom_call.1} parent=11 // pred_region
          _
        $region44: #{tpu_custom_call.1} parent=11 // pred_fallthru
          _
        // Predicated region
        $region45: #{tpu_custom_call.1} parent=11 // pred_check
          %p434 = pneg %p252
        $region46: #{tpu_custom_call.1} parent=11 // pred_check_branch
          %436 = sbr.rel (%p434) target = $region48
        $region47: #{tpu_custom_call.1} parent=11 // pred_region
          _
        $region48: #{tpu_custom_call.1} parent=11 // pred_fallthru
          _
        // Predicated region
        $region49: #{tpu_custom_call.1} parent=11 // pred_check
          %p437 = pneg %p273
        $region50: #{tpu_custom_call.1} parent=11 // pred_check_branch
          %439 = sbr.rel (%p437) target = $region52
        $region51: #{tpu_custom_call.1} parent=11 // pred_region
          _
        $region52: #{tpu_custom_call.1} parent=11 // pred_fallthru
          _
        // Predicated region
        $region53: #{tpu_custom_call.1} parent=11 // pred_check
          %p440 = pneg %p294
        $region54: #{tpu_custom_call.1} parent=11 // pred_check_branch
          %442 = sbr.rel (%p440) target = $region56
        $region55: #{tpu_custom_call.1} parent=11 // pred_region
          _
        $region56: #{tpu_custom_call.1} parent=11 // pred_fallthru
          _
        // Predicated region
        $region57: #{tpu_custom_call.1} parent=11 // pred_check
          %p443 = pneg %p315
        $region58: #{tpu_custom_call.1} parent=11 // pred_check_branch
          %445 = sbr.rel (%p443) target = $region60
        $region59: #{tpu_custom_call.1} parent=11 // pred_region
          _
        $region60: #{tpu_custom_call.1} parent=11 // pred_fallthru
          _
        // Predicated region
        $region61: #{tpu_custom_call.1} parent=11 // pred_check
          %p446 = pneg %p336
        $region62: #{tpu_custom_call.1} parent=11 // pred_check_branch
          %448 = sbr.rel (%p446) target = $region64
        $region63: #{tpu_custom_call.1} parent=11 // pred_region
          _
        $region64: #{tpu_custom_call.1} parent=11 // pred_fallthru
          _
        // Predicated region
        $region65: #{tpu_custom_call.1} parent=11 // pred_check
          %p449 = pneg %p357
        $region66: #{tpu_custom_call.1} parent=11 // pred_check_branch
          %451 = sbr.rel (%p449) target = $region68
        $region67: #{tpu_custom_call.1} parent=11 // pred_region
          _
        $region68: #{tpu_custom_call.1} parent=11 // pred_fallthru
          _
      $region12: #{tpu_custom_call.1} parent=5 // pred_fallthru
        _
      %p452 = scmp.lt.s32.totalorder %s25, 2
      // Predicated region
      $region69: #{tpu_custom_call.1} parent=5 // pred_check
        %p453 = pneg %p452
      $region70: #{tpu_custom_call.1} parent=5 // pred_check_branch
        %455 = sbr.rel (%p453) target = $region72
      $region71: #{tpu_custom_call.1} parent=5 // pred_region
        // Predicated region
        $region73: #{tpu_custom_call.1} parent=71 // pred_check
          %p456 = pneg %p57
        $region74: #{tpu_custom_call.1} parent=71 // pred_check_branch
          %458 = sbr.rel (%p456) target = $region76
        $region75: #{tpu_custom_call.1} parent=71 // pred_region
          %p459 = scmp.lt.s32.totalorder %s32, 1
          %s460 = scalar_select %p459, %s32, 1
          %s461 = smul.addr %s460, 8
          %s462 = scalar_lea.vmem %s0, %s461
        $region76: #{tpu_custom_call.1} parent=71 // pred_fallthru
          _
      $region72: #{tpu_custom_call.1} parent=5 // pred_fallthru
        _
      %p463 = scmp.le.s32.totalorder 1, %s25
      %p464 = scmp.lt.s32.totalorder %s25, 3
      %p465 = pnand %p463, %p464
      %p466 = pneg %p465
      // Predicated region
      $region77: #{tpu_custom_call.1} parent=5 // pred_check
        _
      $region78: #{tpu_custom_call.1} parent=5 // pred_check_branch
        %468 = sbr.rel (%p465) target = $region80
      $region79: #{tpu_custom_call.1} parent=5 // pred_region
        %s469 = ssub.s32 %s25, 1
        // Predicated region
        $region81: #{tpu_custom_call.1} parent=79 // pred_check
          %p470 = pneg %p168
        $region82: #{tpu_custom_call.1} parent=79 // pred_check_branch
          %472 = sbr.rel (%p470) target = $region84
        $region83: #{tpu_custom_call.1} parent=79 // pred_region
          %473 = dma.done [#allocation6], 256
        $region84: #{tpu_custom_call.1} parent=79 // pred_fallthru
          _
        %p474 = scmp.lt.s32.totalorder %s34, 1
        %s475 = scalar_select %p474, %s34, 1
        %s476 = smul.addr %s475, 8
        %s477 = scalar_lea.vmem %s0, %s476
        %p478 = pneg %p63
        %p479 = pneg %p60
        %p480 = pneg %p84
        %p481 = pneg %p81
        %p482 = pneg %p105
        %p483 = pneg %p102
        %p484 = pneg %p126
        %p485 = pneg %p123
        %p486 = pneg %p147
        %p487 = pneg %p144
        %p488 = pneg %p168
        %p489 = pneg %p165
        %p490 = pneg %p189
        %p491 = pneg %p186
        %p492 = pneg %p210
        %p493 = pneg %p207
        %p494 = pneg %p231
        %p495 = pneg %p228
        %p496 = pneg %p252
        %p497 = pneg %p249
        %p498 = pneg %p273
        %p499 = pneg %p270
        %p500 = pneg %p294
        %p501 = pneg %p291
        %p502 = pneg %p315
        %p503 = pneg %p312
        %p504 = pneg %p336
        %p505 = pneg %p333
        %p506 = pneg %p357
        %p507 = pneg %p354
        %p508 = pneg %p385
        %p509 = pneg %p382
        %s510 = sand.u32 %s372, 1
        %s511 = scalar_lea.sflag [#allocation7], %s510
        %s512 = sand.u32 %s372, 1
        %s513 = smul.addr %s512, 8
        %s514 = scalar_lea.vmem [#allocation8], %s513
        %p515 = scmp.lt.s32.totalorder %s34, 1
        %s516 = scalar_select %p515, %s34, 1
        %s517 = smul.addr %s516, 8
        %s518 = scalar_lea.vmem %s0, %s517
        %p520 = scmp.eq.s32.totalorder %s35, 0
        // Predicated region
        $region85: #{tpu_custom_call.1} parent=79 // pred_check
          %p521 = pneg %p520
        $region86: #{tpu_custom_call.1} parent=79 // pred_check_branch
          %523 = sbr.rel (%p521) target = $region88
        $region87: #{tpu_custom_call.1} parent=79 // pred_region
          %v524 = vld [vmem:[%s518] sm:$0xff]
          %v525 = vpack.c.bf16 %v524, %v524
          %v526 = vld [vmem:[%s1] sm:$0xf]
          %v527 = vld [vmem:[%s1 + $0x4] sm:$0xf]
          %v528 = vld [vmem:[%s1 + $0x8] sm:$0xf]
          %v529 = vld [vmem:[%s1 + $0xc] sm:$0xf]
          %v530 = vld [vmem:[%s2] sm:$0x1]
          %v532 = vlaneseq
          %v533 = vshrl.u32 %v532, 7
          %v534 = vsub.s32 0, %v533
          %v535 = vrot.slane %v530, %v534
          %v541 = vunpack.c.l.b16 %v526
          %v542 = vunpack.c.l.b16 %v527
          %v543 = vunpack.c.l.b16 %v528
          %v544 = vunpack.c.l.b16 %v529
          %v545 = vpack.c.b16 %v542, %v541
          %v546 = vpack.c.b16 %v544, %v543
          %vm549 = vcmask 261120
          %v551 = vsel %vm549, %v525, 0
          %553 = vmatprep.subr.bf16.mxu0 0
          %554 = vmatpush1.bf16.msra.mxu0 0
          %555 = vmatprep.subr.bf16.mxu0 0
          %556 = vmatpush1.bf16.msra.mxu0 0
          %557 = vmatprep.subr.bf16.mxu0 0
          %558 = vmatpush1.bf16.msra.mxu0 0
          %559 = vmatprep.subr.bf16.mxu0 0
          %560 = vmatpush1.bf16.msra.mxu0 0
          %561 = vmatprep.subr.bf16.mxu0 0
          %562 = vmatpush1.bf16.msra.mxu0 0
          %563 = vmatprep.subr.bf16.mxu0 0
          %564 = vmatpush1.bf16.msra.mxu0 0
          %565 = vmatprep.subr.bf16.mxu0 0
          %566 = vmatpush1.bf16.msra.mxu0 %v546
          %567 = vmatprep.subr.bf16.mxu0 0
          %568 = vmatpush1.bf16.msra.mxu0 %v545
          %569 = vmatprep.subr.bf16.mxu0 0
          %570 = vmatpush2.bf16.msra.mxu0 0
          %571 = vmatprep.subr.bf16.mxu0 0
          %572 = vmatpush2.bf16.msra.mxu0 0
          %573 = vmatprep.subr.bf16.mxu0 0
          %574 = vmatpush2.bf16.msra.mxu0 0
          %575 = vmatprep.subr.bf16.mxu0 0
          %576 = vmatpush2.bf16.msra.mxu0 0
          %577 = vmatprep.subr.bf16.mxu0 0
          %578 = vmatpush2.bf16.msra.mxu0 0
          %579 = vmatprep.subr.bf16.mxu0 0
          %580 = vmatpush2.bf16.msra.mxu0 0
          %581 = vmatprep.subr.bf16.mxu0 0
          %582 = vmatpush2.bf16.msra.mxu0 0
          %583 = vmatprep.subr.bf16.mxu0 0
          %584 = vmatpush2.bf16.msra.mxu0 0
          %585 = vmatprep.mubr.bf16.mxu0 0
          %586 = vmatmul.mubr.bf16.gmra.mxu0 %v551
          %v587 = vpop.f32.mrf.mxu0
          %v588 = vadd.f32 %v535, %v587
          %v589 = vpop.f32.mrf.mxu0
          %v590 = vpop.f32.mrf.mxu0
          %v591 = vpop.f32.mrf.mxu0
          %592 = vdwg.mxu0
          %v593 = vmul.f32 %v588, 0.35355338
          %v594 = vpack.c.bf16 %v593, %v593
          %vm595 = vcmask 257024
          %596 = vst.msk [vmem:[#allocation2] sm:$0xf] %vm595, %v594
          %v597 = vpack.c.bf16 %v588, %v588
          %v599 = vunpack.c.l.b16 %v597
          %v600 = vpack.c.b16 %v599, %v599
          %601 = vrot.lane.b32.xlu0 %v600, 96
          %v602 = vpop.permute.xlu0 %601
          %604 = vst.msk [vmem:[#allocation3] sm:$0xf] %vm595, %v602
          %605 = vrot.lane.b32.xlu0 %v600, 64
          %v606 = vpop.permute.xlu0 %605
          %608 = vst.msk [vmem:[#allocation4] sm:$0xf] %vm595, %v606
        $region88: #{tpu_custom_call.1} parent=79 // pred_fallthru
          _
        %s609 = smul.u32 %s35, 8
        %s610 = scalar_lea.vmem %s518, %s609
        %v611 = vld [vmem:[%s610] sm:$0xff]
        %s612 = sshra.s32 %s609, 3
        %s613 = sand.u32 %s609, 7
        %s614 = smul.addr %s612, 4
        %s615 = scalar_lea.vmem [#allocation2], %s614
        %v616 = vld [vmem:[%s615] sm:$0xf]
        %v617 = vld [vmem:[#allocation3] sm:$0xf]
        %v618 = vld [vmem:[#allocation4] sm:$0xf]
        %vm619 = vcmask 64512
        %v621 = vsel %vm619, %v616, 0
        %v624 = vsel %vm619, %v617, 0
        %626 = vmatprep.subr.bf16.mxu0 0
        %627 = vmatpush1.bf16.xpose.msra.mxu0 0
        %628 = vmatprep.subr.bf16.mxu0 0
        %629 = vmatpush1.bf16.xpose.msra.mxu0 0
        %630 = vmatprep.subr.bf16.mxu0 0
        %631 = vmatpush1.bf16.xpose.msra.mxu0 0
        %632 = vmatprep.subr.bf16.mxu0 0
        %633 = vmatpush1.bf16.xpose.msra.mxu0 0
        %634 = vmatprep.subr.bf16.mxu0 0
        %635 = vmatpush1.bf16.xpose.msra.mxu0 0
        %636 = vmatprep.subr.bf16.mxu0 0
        %637 = vmatpush1.bf16.xpose.msra.mxu0 0
        %638 = vmatprep.subr.bf16.mxu0 0
        %639 = vmatpush1.bf16.xpose.msra.mxu0 0
        %640 = vmatprep.subr.bf16.mxu0 0
        %641 = vmatpush1.bf16.xpose.msra.mxu0 %v624
        %642 = vmatprep.subr.bf16.mxu0 0
        %643 = vmatpush2.bf16.xpose.msra.mxu0 0
        %644 = vmatprep.subr.bf16.mxu0 0
        %645 = vmatpush2.bf16.xpose.msra.mxu0 0
        %646 = vmatprep.subr.bf16.mxu0 0
        %647 = vmatpush2.bf16.xpose.msra.mxu0 0
        %648 = vmatprep.subr.bf16.mxu0 0
        %649 = vmatpush2.bf16.xpose.msra.mxu0 0
        %650 = vmatprep.subr.bf16.mxu0 0
        %651 = vmatpush2.bf16.xpose.msra.mxu0 0
        %652 = vmatprep.subr.bf16.mxu0 0
        %653 = vmatpush2.bf16.xpose.msra.mxu0 0
        %654 = vmatprep.subr.bf16.mxu0 0
        %655 = vmatpush2.bf16.xpose.msra.mxu0 0
        %656 = vmatprep.subr.bf16.mxu0 0
        %657 = vmatpush2.bf16.xpose.msra.mxu0 0
        %658 = vmatprep.mubr.bf16.mxu0 0
        %659 = vmatmul.mubr.bf16.gmra.mxu0 %v621
        %v660 = vpop.f32.mrf.mxu0
        %v661 = vadd.f32 0.0, %v660
        %v662 = vpop.f32.mrf.mxu0
        %v663 = vpop.f32.mrf.mxu0
        %v664 = vpop.f32.mrf.mxu0
        %665 = vdwg.mxu0
        %v666 = vsel %vm619, %v661, -inf
        %667 = vmax.xlane.f32.xlu0 %v666
        %v668 = vpop.xlane.xlu0 %667
        %v669 = vsub.f32 %v661, %v668
        %v670 = vmul.f32 %v669, 1.442695
        %v671 = vpow.pop %v670
        %v672 = vsel %vm619, %v671, 0.0
        %673 = vadd.xlane.f32.xlu0 %v672
        %v674 = vpop.xlane.xlu0 %673
        %v675 = vrcp.pop %v674
        %v676 = vmul.f32 %v671, %v675
        %v677 = vpack.c.bf16 %v676, %v676
        %v679 = vsel %vm619, %v677, 0
        %vm681 = vcmask 1043456
        %v683 = vsel %vm681, %v618, 0
        %685 = vmatprep.subr.bf16.mxu0 0
        %686 = vmatpush1.bf16.msra.mxu0 0
        %687 = vmatprep.subr.bf16.mxu0 0
        %688 = vmatpush1.bf16.msra.mxu0 0
        %689 = vmatprep.subr.bf16.mxu0 0
        %690 = vmatpush1.bf16.msra.mxu0 0
        %691 = vmatprep.subr.bf16.mxu0 0
        %692 = vmatpush1.bf16.msra.mxu0 0
        %693 = vmatprep.subr.bf16.mxu0 0
        %694 = vmatpush1.bf16.msra.mxu0 0
        %695 = vmatprep.subr.bf16.mxu0 0
        %696 = vmatpush1.bf16.msra.mxu0 0
        %697 = vmatprep.subr.bf16.mxu0 0
        %698 = vmatpush1.bf16.msra.mxu0 0
        %699 = vmatprep.subr.bf16.mxu0 0
        %700 = vmatpush1.bf16.msra.mxu0 %v683
        %701 = vmatprep.subr.bf16.mxu0 0
        %702 = vmatpush2.bf16.msra.mxu0 0
        %703 = vmatprep.subr.bf16.mxu0 0
        %704 = vmatpush2.bf16.msra.mxu0 0
        %705 = vmatprep.subr.bf16.mxu0 0
        %706 = vmatpush2.bf16.msra.mxu0 0
        %707 = vmatprep.subr.bf16.mxu0 0
        %708 = vmatpush2.bf16.msra.mxu0 0
        %709 = vmatprep.subr.bf16.mxu0 0
        %710 = vmatpush2.bf16.msra.mxu0 0
        %711 = vmatprep.subr.bf16.mxu0 0
        %712 = vmatpush2.bf16.msra.mxu0 0
        %713 = vmatprep.subr.bf16.mxu0 0
        %714 = vmatpush2.bf16.msra.mxu0 0
        %715 = vmatprep.subr.bf16.mxu0 0
        %716 = vmatpush2.bf16.msra.mxu0 0
        %717 = vmatprep.mubr.bf16.mxu0 0
        %718 = vmatmul.mubr.bf16.gmra.mxu0 %v679
        %v719 = vpop.f32.mrf.mxu0
        %v720 = vadd.f32 0.0, %v719
        %v721 = vpop.f32.mrf.mxu0
        %v722 = vpop.f32.mrf.mxu0
        %v723 = vpop.f32.mrf.mxu0
        %724 = vdwg.mxu0
        %v726 = vunpack.c.l.b16 %v616
        %v727 = vpack.c.b16 %v726, %v726
        %728 = vrot.lane.b32.xlu0 %v727, 120
        %v729 = vpop.permute.xlu0 %728
        %v731 = vunpack.c.l.b16 %v617
        %v732 = vpack.c.b16 %v731, %v731
        %733 = vrot.lane.b32.xlu0 %v732, 120
        %v734 = vpop.permute.xlu0 %733
        %v736 = vsel %vm619, %v729, 0
        %v739 = vsel %vm619, %v734, 0
        %741 = vmatprep.subr.bf16.mxu0 0
        %742 = vmatpush1.bf16.xpose.msra.mxu0 0
        %743 = vmatprep.subr.bf16.mxu0 0
        %744 = vmatpush1.bf16.xpose.msra.mxu0 0
        %745 = vmatprep.subr.bf16.mxu0 0
        %746 = vmatpush1.bf16.xpose.msra.mxu0 0
        %747 = vmatprep.subr.bf16.mxu0 0
        %748 = vmatpush1.bf16.xpose.msra.mxu0 0
        %749 = vmatprep.subr.bf16.mxu0 0
        %750 = vmatpush1.bf16.xpose.msra.mxu0 0
        %751 = vmatprep.subr.bf16.mxu0 0
        %752 = vmatpush1.bf16.xpose.msra.mxu0 0
        %753 = vmatprep.subr.bf16.mxu0 0
        %754 = vmatpush1.bf16.xpose.msra.mxu0 0
        %755 = vmatprep.subr.bf16.mxu0 0
        %756 = vmatpush1.bf16.xpose.msra.mxu0 %v739
        %757 = vmatprep.subr.bf16.mxu0 0
        %758 = vmatpush2.bf16.xpose.msra.mxu0 0
        %759 = vmatprep.subr.bf16.mxu0 0
        %760 = vmatpush2.bf16.xpose.msra.mxu0 0
        %761 = vmatprep.subr.bf16.mxu0 0
        %762 = vmatpush2.bf16.xpose.msra.mxu0 0
        %763 = vmatprep.subr.bf16.mxu0 0
        %764 = vmatpush2.bf16.xpose.msra.mxu0 0
        %765 = vmatprep.subr.bf16.mxu0 0
        %766 = vmatpush2.bf16.xpose.msra.mxu0 0
        %767 = vmatprep.subr.bf16.mxu0 0
        %768 = vmatpush2.bf16.xpose.msra.mxu0 0
        %769 = vmatprep.subr.bf16.mxu0 0
        %770 = vmatpush2.bf16.xpose.msra.mxu0 0
        %771 = vmatprep.subr.bf16.mxu0 0
        %772 = vmatpush2.bf16.xpose.msra.mxu0 0
        %773 = vmatprep.mubr.bf16.mxu0 0
        %774 = vmatmul.mubr.bf16.gmra.mxu0 %v736
        %v775 = vpop.f32.mrf.mxu0
        %v776 = vadd.f32 0.0, %v775
        %v777 = vpop.f32.mrf.mxu0
        %v778 = vpop.f32.mrf.mxu0
        %v779 = vpop.f32.mrf.mxu0
        %780 = vdwg.mxu0
        %v781 = vsel %vm619, %v776, -inf
        %782 = vmax.xlane.f32.xlu0 %v781
        %v783 = vpop.xlane.xlu0 %782
        %v784 = vsub.f32 %v776, %v783
        %v785 = vmul.f32 %v784, 1.442695
        %v786 = vpow.pop %v785
        %v787 = vsel %vm619, %v786, 0.0
        %788 = vadd.xlane.f32.xlu0 %v787
        %v789 = vpop.xlane.xlu0 %788
        %v790 = vrcp.pop %v789
        %v791 = vmul.f32 %v786, %v790
        %v792 = vpack.c.bf16 %v791, %v791
        %v794 = vunpack.c.l.b16 %v618
        %v795 = vpack.c.b16 %v794, %v794
        %796 = vrot.lane.b32.xlu0 %v795, 120
        %v797 = vpop.permute.xlu0 %796
        %v799 = vsel %vm619, %v792, 0
        %v802 = vsel %vm681, %v797, 0
        %804 = vmatprep.subr.bf16.mxu0 0
        %805 = vmatpush1.bf16.msra.mxu0 0
        %806 = vmatprep.subr.bf16.mxu0 0
        %807 = vmatpush1.bf16.msra.mxu0 0
        %808 = vmatprep.subr.bf16.mxu0 0
        %809 = vmatpush1.bf16.msra.mxu0 0
        %810 = vmatprep.subr.bf16.mxu0 0
        %811 = vmatpush1.bf16.msra.mxu0 0
        %812 = vmatprep.subr.bf16.mxu0 0
        %813 = vmatpush1.bf16.msra.mxu0 0
        %814 = vmatprep.subr.bf16.mxu0 0
        %815 = vmatpush1.bf16.msra.mxu0 0
        %816 = vmatprep.subr.bf16.mxu0 0
        %817 = vmatpush1.bf16.msra.mxu0 0
        %818 = vmatprep.subr.bf16.mxu0 0
        %819 = vmatpush1.bf16.msra.mxu0 %v802
        %820 = vmatprep.subr.bf16.mxu0 0
        %821 = vmatpush2.bf16.msra.mxu0 0
        %822 = vmatprep.subr.bf16.mxu0 0
        %823 = vmatpush2.bf16.msra.mxu0 0
        %824 = vmatprep.subr.bf16.mxu0 0
        %825 = vmatpush2.bf16.msra.mxu0 0
        %826 = vmatprep.subr.bf16.mxu0 0
        %827 = vmatpush2.bf16.msra.mxu0 0
        %828 = vmatprep.subr.bf16.mxu0 0
        %829 = vmatpush2.bf16.msra.mxu0 0
        %830 = vmatprep.subr.bf16.mxu0 0
        %831 = vmatpush2.bf16.msra.mxu0 0
        %832 = vmatprep.subr.bf16.mxu0 0
        %833 = vmatpush2.bf16.msra.mxu0 0
        %834 = vmatprep.subr.bf16.mxu0 0
        %835 = vmatpush2.bf16.msra.mxu0 0
        %836 = vmatprep.mubr.bf16.mxu0 0
        %837 = vmatmul.mubr.bf16.gmra.mxu0 %v799
        %v838 = vpop.f32.mrf.mxu0
        %v839 = vadd.f32 0.0, %v838
        %v840 = vpop.f32.mrf.mxu0
        %v841 = vpop.f32.mrf.mxu0
        %v842 = vpop.f32.mrf.mxu0
        %843 = vdwg.mxu0
        %844 = vrot.lane.b32.xlu0 %v727, 112
        %v845 = vpop.permute.xlu0 %844
        %846 = vrot.lane.b32.xlu0 %v732, 112
        %v847 = vpop.permute.xlu0 %846
        %v849 = vsel %vm619, %v845, 0
        %v852 = vsel %vm619, %v847, 0
        %854 = vmatprep.subr.bf16.mxu0 0
        %855 = vmatpush1.bf16.xpose.msra.mxu0 0
        %856 = vmatprep.subr.bf16.mxu0 0
        %857 = vmatpush1.bf16.xpose.msra.mxu0 0
        %858 = vmatprep.subr.bf16.mxu0 0
        %859 = vmatpush1.bf16.xpose.msra.mxu0 0
        %860 = vmatprep.subr.bf16.mxu0 0
        %861 = vmatpush1.bf16.xpose.msra.mxu0 0
        %862 = vmatprep.subr.bf16.mxu0 0
        %863 = vmatpush1.bf16.xpose.msra.mxu0 0
        %864 = vmatprep.subr.bf16.mxu0 0
        %865 = vmatpush1.bf16.xpose.msra.mxu0 0
        %866 = vmatprep.subr.bf16.mxu0 0
        %867 = vmatpush1.bf16.xpose.msra.mxu0 0
        %868 = vmatprep.subr.bf16.mxu0 0
        %869 = vmatpush1.bf16.xpose.msra.mxu0 %v852
        %870 = vmatprep.subr.bf16.mxu0 0
        %871 = vmatpush2.bf16.xpose.msra.mxu0 0
        %872 = vmatprep.subr.bf16.mxu0 0
        %873 = vmatpush2.bf16.xpose.msra.mxu0 0
        %874 = vmatprep.subr.bf16.mxu0 0
        %875 = vmatpush2.bf16.xpose.msra.mxu0 0
        %876 = vmatprep.subr.bf16.mxu0 0
        %877 = vmatpush2.bf16.xpose.msra.mxu0 0
        %878 = vmatprep.subr.bf16.mxu0 0
        %879 = vmatpush2.bf16.xpose.msra.mxu0 0
        %880 = vmatprep.subr.bf16.mxu0 0
        %881 = vmatpush2.bf16.xpose.msra.mxu0 0
        %882 = vmatprep.subr.bf16.mxu0 0
        %883 = vmatpush2.bf16.xpose.msra.mxu0 0
        %884 = vmatprep.subr.bf16.mxu0 0
        %885 = vmatpush2.bf16.xpose.msra.mxu0 0
        %886 = vmatprep.mubr.bf16.mxu0 0
        %887 = vmatmul.mubr.bf16.gmra.mxu0 %v849
        %v888 = vpop.f32.mrf.mxu0
        %v889 = vadd.f32 0.0, %v888
        %v890 = vpop.f32.mrf.mxu0
        %v891 = vpop.f32.mrf.mxu0
        %v892 = vpop.f32.mrf.mxu0
        %893 = vdwg.mxu0
        %v894 = vsel %vm619, %v889, -inf
        %895 = vmax.xlane.f32.xlu0 %v894
        %v896 = vpop.xlane.xlu0 %895
        %v897 = vsub.f32 %v889, %v896
        %v898 = vmul.f32 %v897, 1.442695
        %v899 = vpow.pop %v898
        %v900 = vsel %vm619, %v899, 0.0
        %901 = vadd.xlane.f32.xlu0 %v900
        %v902 = vpop.xlane.xlu0 %901
        %v903 = vrcp.pop %v902
        %v904 = vmul.f32 %v899, %v903
        %v905 = vpack.c.bf16 %v904, %v904
        %906 = vrot.lane.b32.xlu0 %v795, 112
        %v907 = vpop.permute.xlu0 %906
        %v909 = vsel %vm619, %v905, 0
        %v912 = vsel %vm681, %v907, 0
        %914 = vmatprep.subr.bf16.mxu0 0
        %915 = vmatpush1.bf16.msra.mxu0 0
        %916 = vmatprep.subr.bf16.mxu0 0
        %917 = vmatpush1.bf16.msra.mxu0 0
        %918 = vmatprep.subr.bf16.mxu0 0
        %919 = vmatpush1.bf16.msra.mxu0 0
        %920 = vmatprep.subr.bf16.mxu0 0
        %921 = vmatpush1.bf16.msra.mxu0 0
        %922 = vmatprep.subr.bf16.mxu0 0
        %923 = vmatpush1.bf16.msra.mxu0 0
        %924 = vmatprep.subr.bf16.mxu0 0
        %925 = vmatpush1.bf16.msra.mxu0 0
        %926 = vmatprep.subr.bf16.mxu0 0
        %927 = vmatpush1.bf16.msra.mxu0 0
        %928 = vmatprep.subr.bf16.mxu0 0
        %929 = vmatpush1.bf16.msra.mxu0 %v912
        %930 = vmatprep.subr.bf16.mxu0 0
        %931 = vmatpush2.bf16.msra.mxu0 0
        %932 = vmatprep.subr.bf16.mxu0 0
        %933 = vmatpush2.bf16.msra.mxu0 0
        %934 = vmatprep.subr.bf16.mxu0 0
        %935 = vmatpush2.bf16.msra.mxu0 0
        %936 = vmatprep.subr.bf16.mxu0 0
        %937 = vmatpush2.bf16.msra.mxu0 0
        %938 = vmatprep.subr.bf16.mxu0 0
        %939 = vmatpush2.bf16.msra.mxu0 0
        %940 = vmatprep.subr.bf16.mxu0 0
        %941 = vmatpush2.bf16.msra.mxu0 0
        %942 = vmatprep.subr.bf16.mxu0 0
        %943 = vmatpush2.bf16.msra.mxu0 0
        %944 = vmatprep.subr.bf16.mxu0 0
        %945 = vmatpush2.bf16.msra.mxu0 0
        %946 = vmatprep.mubr.bf16.mxu0 0
        %947 = vmatmul.mubr.bf16.gmra.mxu0 %v909
        %v948 = vpop.f32.mrf.mxu0
        %v949 = vadd.f32 0.0, %v948
        %v950 = vpop.f32.mrf.mxu0
        %v951 = vpop.f32.mrf.mxu0
        %v952 = vpop.f32.mrf.mxu0
        %953 = vdwg.mxu0
        %954 = vrot.lane.b32.xlu0 %v727, 104
        %v955 = vpop.permute.xlu0 %954
        %956 = vrot.lane.b32.xlu0 %v732, 104
        %v957 = vpop.permute.xlu0 %956
        %v959 = vsel %vm619, %v955, 0
        %v962 = vsel %vm619, %v957, 0
        %964 = vmatprep.subr.bf16.mxu0 0
        %965 = vmatpush1.bf16.xpose.msra.mxu0 0
        %966 = vmatprep.subr.bf16.mxu0 0
        %967 = vmatpush1.bf16.xpose.msra.mxu0 0
        %968 = vmatprep.subr.bf16.mxu0 0
        %969 = vmatpush1.bf16.xpose.msra.mxu0 0
        %970 = vmatprep.subr.bf16.mxu0 0
        %971 = vmatpush1.bf16.xpose.msra.mxu0 0
        %972 = vmatprep.subr.bf16.mxu0 0
        %973 = vmatpush1.bf16.xpose.msra.mxu0 0
        %974 = vmatprep.subr.bf16.mxu0 0
        %975 = vmatpush1.bf16.xpose.msra.mxu0 0
        %976 = vmatprep.subr.bf16.mxu0 0
        %977 = vmatpush1.bf16.xpose.msra.mxu0 0
        %978 = vmatprep.subr.bf16.mxu0 0
        %979 = vmatpush1.bf16.xpose.msra.mxu0 %v962
        %980 = vmatprep.subr.bf16.mxu0 0
        %981 = vmatpush2.bf16.xpose.msra.mxu0 0
        %982 = vmatprep.subr.bf16.mxu0 0
        %983 = vmatpush2.bf16.xpose.msra.mxu0 0
        %984 = vmatprep.subr.bf16.mxu0 0
        %985 = vmatpush2.bf16.xpose.msra.mxu0 0
        %986 = vmatprep.subr.bf16.mxu0 0
        %987 = vmatpush2.bf16.xpose.msra.mxu0 0
        %988 = vmatprep.subr.bf16.mxu0 0
        %989 = vmatpush2.bf16.xpose.msra.mxu0 0
        %990 = vmatprep.subr.bf16.mxu0 0
        %991 = vmatpush2.bf16.xpose.msra.mxu0 0
        %992 = vmatprep.subr.bf16.mxu0 0
        %993 = vmatpush2.bf16.xpose.msra.mxu0 0
        %994 = vmatprep.subr.bf16.mxu0 0
        %995 = vmatpush2.bf16.xpose.msra.mxu0 0
        %996 = vmatprep.mubr.bf16.mxu0 0
        %997 = vmatmul.mubr.bf16.gmra.mxu0 %v959
        %v998 = vpop.f32.mrf.mxu0
        %v999 = vadd.f32 0.0, %v998
        %v1000 = vpop.f32.mrf.mxu0
        %v1001 = vpop.f32.mrf.mxu0
        %v1002 = vpop.f32.mrf.mxu0
        %1003 = vdwg.mxu0
        %v1004 = vsel %vm619, %v999, -inf
        %1005 = vmax.xlane.f32.xlu0 %v1004
        %v1006 = vpop.xlane.xlu0 %1005
        %v1007 = vsub.f32 %v999, %v1006
        %v1008 = vmul.f32 %v1007, 1.442695
        %v1009 = vpow.pop %v1008
        %v1010 = vsel %vm619, %v1009, 0.0
        %1011 = vadd.xlane.f32.xlu0 %v1010
        %v1012 = vpop.xlane.xlu0 %1011
        %v1013 = vrcp.pop %v1012
        %v1014 = vmul.f32 %v1009, %v1013
        %v1015 = vpack.c.bf16 %v1014, %v1014
        %1016 = vrot.lane.b32.xlu0 %v795, 104
        %v1017 = vpop.permute.xlu0 %1016
        %v1019 = vsel %vm619, %v1015, 0
        %v1022 = vsel %vm681, %v1017, 0
        %1024 = vmatprep.subr.bf16.mxu0 0
        %1025 = vmatpush1.bf16.msra.mxu0 0
        %1026 = vmatprep.subr.bf16.mxu0 0
        %1027 = vmatpush1.bf16.msra.mxu0 0
        %1028 = vmatprep.subr.bf16.mxu0 0
        %1029 = vmatpush1.bf16.msra.mxu0 0
        %1030 = vmatprep.subr.bf16.mxu0 0
        %1031 = vmatpush1.bf16.msra.mxu0 0
        %1032 = vmatprep.subr.bf16.mxu0 0
        %1033 = vmatpush1.bf16.msra.mxu0 0
        %1034 = vmatprep.subr.bf16.mxu0 0
        %1035 = vmatpush1.bf16.msra.mxu0 0
        %1036 = vmatprep.subr.bf16.mxu0 0
        %1037 = vmatpush1.bf16.msra.mxu0 0
        %1038 = vmatprep.subr.bf16.mxu0 0
        %1039 = vmatpush1.bf16.msra.mxu0 %v1022
        %1040 = vmatprep.subr.bf16.mxu0 0
        %1041 = vmatpush2.bf16.msra.mxu0 0
        %1042 = vmatprep.subr.bf16.mxu0 0
        %1043 = vmatpush2.bf16.msra.mxu0 0
        %1044 = vmatprep.subr.bf16.mxu0 0
        %1045 = vmatpush2.bf16.msra.mxu0 0
        %1046 = vmatprep.subr.bf16.mxu0 0
        %1047 = vmatpush2.bf16.msra.mxu0 0
        %1048 = vmatprep.subr.bf16.mxu0 0
        %1049 = vmatpush2.bf16.msra.mxu0 0
        %1050 = vmatprep.subr.bf16.mxu0 0
        %1051 = vmatpush2.bf16.msra.mxu0 0
        %1052 = vmatprep.subr.bf16.mxu0 0
        %1053 = vmatpush2.bf16.msra.mxu0 0
        %1054 = vmatprep.subr.bf16.mxu0 0
        %1055 = vmatpush2.bf16.msra.mxu0 0
        %1056 = vmatprep.mubr.bf16.mxu0 0
        %1057 = vmatmul.mubr.bf16.gmra.mxu0 %v1019
        %v1058 = vpop.f32.mrf.mxu0
        %v1059 = vadd.f32 0.0, %v1058
        %v1060 = vpop.f32.mrf.mxu0
        %v1061 = vpop.f32.mrf.mxu0
        %v1062 = vpop.f32.mrf.mxu0
        %1063 = vdwg.mxu0
        %1065 = vrot.lane.b32.xlu0 %v839, 8
        %v1066 = vpop.permute.xlu0 %1065
        %1069 = vrot.lane.b32.xlu0 %v949, 16
        %v1070 = vpop.permute.xlu0 %1069
        %1073 = vrot.lane.b32.xlu0 %v1059, 24
        %v1074 = vpop.permute.xlu0 %1073
        %v1076 = vsel %vm619, %v720, %v1066
        %vm1077 = vcmask 130048
        %v1078 = vsel %vm1077, %v1076, %v1070
        %vm1079 = vcmask 195584
        %v1080 = vsel %vm1079, %v1078, %v1074
        %v1081 = vpack.c.bf16 %v1080, %v1080
        %v1082 = vld [vmem:[%s3] sm:$0xf]
        %v1083 = vld [vmem:[%s3 + $0x4] sm:$0xf]
        %v1084 = vld [vmem:[%s3 + $0x8] sm:$0xf]
        %v1085 = vld [vmem:[%s3 + $0xc] sm:$0xf]
        %v1086 = vld [vmem:[%s4] sm:$0x1]
        %v1088 = vlaneseq
        %v1089 = vshrl.u32 %v1088, 7
        %v1090 = vsub.s32 0, %v1089
        %v1091 = vrot.slane %v1086, %v1090
        %v1097 = vunpack.c.l.b16 %v1082
        %v1098 = vunpack.c.l.b16 %v1083
        %v1099 = vunpack.c.l.b16 %v1084
        %v1100 = vunpack.c.l.b16 %v1085
        %v1101 = vpack.c.b16 %v1098, %v1097
        %v1102 = vpack.c.b16 %v1100, %v1099
        %vm1105 = vcmask 261120
        %v1107 = vsel %vm1105, %v1081, 0
        %1109 = vmatprep.subr.bf16.mxu0 0
        %1110 = vmatpush1.bf16.msra.mxu0 0
        %1111 = vmatprep.subr.bf16.mxu0 0
        %1112 = vmatpush1.bf16.msra.mxu0 0
        %1113 = vmatprep.subr.bf16.mxu0 0
        %1114 = vmatpush1.bf16.msra.mxu0 0
        %1115 = vmatprep.subr.bf16.mxu0 0
        %1116 = vmatpush1.bf16.msra.mxu0 0
        %1117 = vmatprep.subr.bf16.mxu0 0
        %1118 = vmatpush1.bf16.msra.mxu0 0
        %1119 = vmatprep.subr.bf16.mxu0 0
        %1120 = vmatpush1.bf16.msra.mxu0 0
        %1121 = vmatprep.subr.bf16.mxu0 0
        %1122 = vmatpush1.bf16.msra.mxu0 %v1102
        %1123 = vmatprep.subr.bf16.mxu0 0
        %1124 = vmatpush1.bf16.msra.mxu0 %v1101
        %1125 = vmatprep.subr.bf16.mxu0 0
        %1126 = vmatpush2.bf16.msra.mxu0 0
        %1127 = vmatprep.subr.bf16.mxu0 0
        %1128 = vmatpush2.bf16.msra.mxu0 0
        %1129 = vmatprep.subr.bf16.mxu0 0
        %1130 = vmatpush2.bf16.msra.mxu0 0
        %1131 = vmatprep.subr.bf16.mxu0 0
        %1132 = vmatpush2.bf16.msra.mxu0 0
        %1133 = vmatprep.subr.bf16.mxu0 0
        %1134 = vmatpush2.bf16.msra.mxu0 0
        %1135 = vmatprep.subr.bf16.mxu0 0
        %1136 = vmatpush2.bf16.msra.mxu0 0
        %1137 = vmatprep.subr.bf16.mxu0 0
        %1138 = vmatpush2.bf16.msra.mxu0 0
        %1139 = vmatprep.subr.bf16.mxu0 0
        %1140 = vmatpush2.bf16.msra.mxu0 0
        %1141 = vmatprep.mubr.bf16.mxu0 0
        %1142 = vmatmul.mubr.bf16.gmra.mxu0 %v1107
        %v1143 = vpop.f32.mrf.mxu0
        %v1144 = vadd.f32 %v1091, %v1143
        %v1145 = vpop.f32.mrf.mxu0
        %v1146 = vpop.f32.mrf.mxu0
        %v1147 = vpop.f32.mrf.mxu0
        %1148 = vdwg.mxu0
        %v1149 = vadd.f32 %v611, %v1144
        %v1150 = vld [vmem:[%s9] sm:$0x1]
        %v1151 = vld [vmem:[%s10] sm:$0x1]
        %v1152 = vsel %vm1105, %v1149, 0.0
        %1153 = vadd.xlane.f32.xlu0 %v1152
        %v1154 = vpop.xlane.xlu0 %1153
        %v1155 = vrcp.pop 32.0
        %v1156 = vmul.f32 %v1154, %v1155
        %v1157 = vsub.f32 %v1149, %v1156
        %v1158 = vmul.f32 %v1157, %v1157
        %v1159 = vsel %vm1105, %v1158, 0.0
        %1160 = vadd.xlane.f32.xlu0 %v1159
        %v1161 = vpop.xlane.xlu0 %1160
        %v1162 = vmul.f32 %v1161, %v1155
        %v1163 = vadd.f32 %v1162, 1e-05
        %v1164 = vrsqrt.pop %v1163
        %v1165 = vmul.f32 %v1157, %v1164
        %v1167 = vlaneseq
        %v1168 = vshrl.u32 %v1167, 7
        %v1169 = vsub.s32 0, %v1168
        %v1170 = vrot.slane %v1150, %v1169
        %v1172 = vmul.f32 %v1165, %v1170
        %v1174 = vlaneseq
        %v1175 = vshrl.u32 %v1174, 7
        %v1176 = vsub.s32 0, %v1175
        %v1177 = vrot.slane %v1151, %v1176
        %v1179 = vadd.f32 %v1172, %v1177
        %v1180 = vpack.c.bf16 %v1179, %v1179
        %v1181 = vld [vmem:[#allocation5] sm:$0xf]
        %v1182 = vld [vmem:[#allocation5 + $0x4] sm:$0xf]
        %v1183 = vld [vmem:[#allocation5 + $0x8] sm:$0xf]
        %v1184 = vld [vmem:[#allocation5 + $0xc] sm:$0xf]
        %v1185 = vld [vmem:[%s6] sm:$0x1]
        %v1187 = vlaneseq
        %v1188 = vshrl.u32 %v1187, 7
        %v1189 = vsub.s32 0, %v1188
        %v1190 = vrot.slane %v1185, %v1189
        %v1196 = vunpack.c.l.b16 %v1181
        %v1197 = vunpack.c.l.b16 %v1182
        %v1198 = vunpack.c.l.b16 %v1183
        %v1199 = vunpack.c.l.b16 %v1184
        %v1200 = vpack.c.b16 %v1197, %v1196
        %v1201 = vpack.c.b16 %v1199, %v1198
        %v1205 = vsel %vm1105, %v1180, 0
        %1207 = vmatprep.subr.bf16.mxu0 0
        %1208 = vmatpush1.bf16.msra.mxu0 0
        %1209 = vmatprep.subr.bf16.mxu0 0
        %1210 = vmatpush1.bf16.msra.mxu0 0
        %1211 = vmatprep.subr.bf16.mxu0 0
        %1212 = vmatpush1.bf16.msra.mxu0 0
        %1213 = vmatprep.subr.bf16.mxu0 0
        %1214 = vmatpush1.bf16.msra.mxu0 0
        %1215 = vmatprep.subr.bf16.mxu0 0
        %1216 = vmatpush1.bf16.msra.mxu0 0
        %1217 = vmatprep.subr.bf16.mxu0 0
        %1218 = vmatpush1.bf16.msra.mxu0 0
        %1219 = vmatprep.subr.bf16.mxu0 0
        %1220 = vmatpush1.bf16.msra.mxu0 %v1201
        %1221 = vmatprep.subr.bf16.mxu0 0
        %1222 = vmatpush1.bf16.msra.mxu0 %v1200
        %1223 = vmatprep.subr.bf16.mxu0 0
        %1224 = vmatpush2.bf16.msra.mxu0 0
        %1225 = vmatprep.subr.bf16.mxu0 0
        %1226 = vmatpush2.bf16.msra.mxu0 0
        %1227 = vmatprep.subr.bf16.mxu0 0
        %1228 = vmatpush2.bf16.msra.mxu0 0
        %1229 = vmatprep.subr.bf16.mxu0 0
        %1230 = vmatpush2.bf16.msra.mxu0 0
        %1231 = vmatprep.subr.bf16.mxu0 0
        %1232 = vmatpush2.bf16.msra.mxu0 0
        %1233 = vmatprep.subr.bf16.mxu0 0
        %1234 = vmatpush2.bf16.msra.mxu0 0
        %1235 = vmatprep.subr.bf16.mxu0 0
        %1236 = vmatpush2.bf16.msra.mxu0 0
        %1237 = vmatprep.subr.bf16.mxu0 0
        %1238 = vmatpush2.bf16.msra.mxu0 0
        %1239 = vmatprep.mubr.bf16.mxu0 0
        %1240 = vmatmul.mubr.bf16.gmra.mxu0 %v1205
        %v1241 = vpop.f32.mrf.mxu0
        %v1242 = vadd.f32 %v1190, %v1241
        %v1243 = vpop.f32.mrf.mxu0
        %v1244 = vpop.f32.mrf.mxu0
        %v1245 = vpop.f32.mrf.mxu0
        %1246 = vdwg.mxu0
        %v1247 = vmax.f32 %v1242, 0.0
        %v1248 = vpack.c.bf16 %v1247, %v1247
        %v1249 = vld [vmem:[%s7] sm:$0xf]
        %v1250 = vld [vmem:[%s7 + $0x4] sm:$0xf]
        %v1251 = vld [vmem:[%s7 + $0x8] sm:$0xf]
        %v1252 = vld [vmem:[%s7 + $0xc] sm:$0xf]
        %v1253 = vld [vmem:[%s7 + $0x10] sm:$0xf]
        %v1254 = vld [vmem:[%s7 + $0x14] sm:$0xf]
        %v1255 = vld [vmem:[%s7 + $0x18] sm:$0xf]
        %v1256 = vld [vmem:[%s7 + $0x1c] sm:$0xf]
        %v1257 = vld [vmem:[%s8] sm:$0x1]
        %v1259 = vlaneseq
        %v1260 = vshrl.u32 %v1259, 7
        %v1261 = vsub.s32 0, %v1260
        %v1262 = vrot.slane %v1257, %v1261
        %v1272 = vunpack.c.l.b16 %v1249
        %v1273 = vunpack.c.l.b16 %v1250
        %v1274 = vunpack.c.l.b16 %v1251
        %v1275 = vunpack.c.l.b16 %v1252
        %v1276 = vunpack.c.l.b16 %v1253
        %v1277 = vunpack.c.l.b16 %v1254
        %v1278 = vunpack.c.l.b16 %v1255
        %v1279 = vunpack.c.l.b16 %v1256
        %v1280 = vpack.c.b16 %v1273, %v1272
        %v1281 = vpack.c.b16 %v1275, %v1274
        %v1282 = vpack.c.b16 %v1277, %v1276
        %v1283 = vpack.c.b16 %v1279, %v1278
        %vm1288 = vcmask 523264
        %v1290 = vsel %vm1288, %v1248, 0
        %1292 = vmatprep.subr.bf16.mxu0 0
        %1293 = vmatpush1.bf16.msra.mxu0 0
        %1294 = vmatprep.subr.bf16.mxu0 0
        %1295 = vmatpush1.bf16.msra.mxu0 0
        %1296 = vmatprep.subr.bf16.mxu0 0
        %1297 = vmatpush1.bf16.msra.mxu0 0
        %1298 = vmatprep.subr.bf16.mxu0 0
        %1299 = vmatpush1.bf16.msra.mxu0 0
        %1300 = vmatprep.subr.bf16.mxu0 0
        %1301 = vmatpush1.bf16.msra.mxu0 %v1283
        %1302 = vmatprep.subr.bf16.mxu0 0
        %1303 = vmatpush1.bf16.msra.mxu0 %v1282
        %1304 = vmatprep.subr.bf16.mxu0 0
        %1305 = vmatpush1.bf16.msra.mxu0 %v1281
        %1306 = vmatprep.subr.bf16.mxu0 0
        %1307 = vmatpush1.bf16.msra.mxu0 %v1280
        %1308 = vmatprep.subr.bf16.mxu0 0
        %1309 = vmatpush2.bf16.msra.mxu0 0
        %1310 = vmatprep.subr.bf16.mxu0 0
        %1311 = vmatpush2.bf16.msra.mxu0 0
        %1312 = vmatprep.subr.bf16.mxu0 0
        %1313 = vmatpush2.bf16.msra.mxu0 0
        %1314 = vmatprep.subr.bf16.mxu0 0
        %1315 = vmatpush2.bf16.msra.mxu0 0
        %1316 = vmatprep.subr.bf16.mxu0 0
        %1317 = vmatpush2.bf16.msra.mxu0 0
        %1318 = vmatprep.subr.bf16.mxu0 0
        %1319 = vmatpush2.bf16.msra.mxu0 0
        %1320 = vmatprep.subr.bf16.mxu0 0
        %1321 = vmatpush2.bf16.msra.mxu0 0
        %1322 = vmatprep.subr.bf16.mxu0 0
        %1323 = vmatpush2.bf16.msra.mxu0 0
        %1324 = vmatprep.mubr.bf16.mxu0 0
        %1325 = vmatmul.mubr.bf16.gmra.mxu0 %v1290
        %v1326 = vpop.f32.mrf.mxu0
        %v1327 = vadd.f32 %v1262, %v1326
        %v1328 = vpop.f32.mrf.mxu0
        %v1329 = vpop.f32.mrf.mxu0
        %v1330 = vpop.f32.mrf.mxu0
        %1331 = vdwg.mxu0
        %v1332 = vadd.f32 %v1179, %v1327
        %v1333 = vld [vmem:[%s11] sm:$0x1]
        %v1334 = vld [vmem:[%s12] sm:$0x1]
        %v1335 = vsel %vm1105, %v1332, 0.0
        %1336 = vadd.xlane.f32.xlu0 %v1335
        %v1337 = vpop.xlane.xlu0 %1336
        %v1338 = vmul.f32 %v1337, %v1155
        %v1339 = vsub.f32 %v1332, %v1338
        %v1340 = vmul.f32 %v1339, %v1339
        %v1341 = vsel %vm1105, %v1340, 0.0
        %1342 = vadd.xlane.f32.xlu0 %v1341
        %v1343 = vpop.xlane.xlu0 %1342
        %v1344 = vmul.f32 %v1343, %v1155
        %v1345 = vadd.f32 %v1344, 1e-05
        %v1346 = vrsqrt.pop %v1345
        %v1347 = vmul.f32 %v1339, %v1346
        %v1349 = vlaneseq
        %v1350 = vshrl.u32 %v1349, 7
        %v1351 = vsub.s32 0, %v1350
        %v1352 = vrot.slane %v1333, %v1351
        %v1354 = vmul.f32 %v1347, %v1352
        %v1356 = vlaneseq
        %v1357 = vshrl.u32 %v1356, 7
        %v1358 = vsub.s32 0, %v1357
        %v1359 = vrot.slane %v1334, %v1358
        %v1361 = vadd.f32 %v1354, %v1359
        %1362 = vst.msk [vmem:[%s514] sm:$0xff] %vm1105, %v1361
        %s1363 = sand.u32 %s372, 1
        %s1364 = scalar_lea.sflag [#allocation7], %s1363
        %s1365 = sand.u32 %s372, 1
        %s1366 = smul.addr %s1365, 8
        %s1367 = scalar_lea.vmem [#allocation8], %s1366
        // Predicated region
        $region89: #{tpu_custom_call.1} parent=79 // pred_check
          %p1368 = pneg %p382
        $region90: #{tpu_custom_call.1} parent=79 // pred_check_branch
          %1370 = sbr.rel (%p1368) target = $region92
        $region91: #{tpu_custom_call.1} parent=79 // pred_region
          %s1372 = ssub.s32 128, 128
          %1373 = vsyncadd %s1364, %s1372
          %s1374 = sadd.s32 %s35, %s34
          %s1375 = smul.addr %s1374, 128
          %s1376 = scalar_lea.hbm %s15, %s1375
          %s1378 = sshll.u32 %s1367, 4
          %s1379 = int_to_ptr.vmem [resolvable:$true] %s1378
          %1381 = dma.vmem_to_hbm [thread:$0]  %s1379, 128, %s1376, %s1364
        $region92: #{tpu_custom_call.1} parent=79 // pred_fallthru
          _
      $region80: #{tpu_custom_call.1} parent=5 // pred_fallthru
        _
      %p1382 = scmp.le.s32.totalorder 2, %s25
      // Predicated region
      $region93: #{tpu_custom_call.1} parent=5 // pred_check
        %p1383 = pneg %p1382
      $region94: #{tpu_custom_call.1} parent=5 // pred_check_branch
        %1385 = sbr.rel (%p1383) target = $region96
      $region95: #{tpu_custom_call.1} parent=5 // pred_region
        %s1386 = ssub.s32 %s25, 2
        // Predicated region
        $region97: #{tpu_custom_call.1} parent=95 // pred_check
          %p1387 = pneg %p388
        $region98: #{tpu_custom_call.1} parent=95 // pred_check_branch
          %1389 = sbr.rel (%p1387) target = $region100
        $region99: #{tpu_custom_call.1} parent=95 // pred_region
          %s1390 = sand.u32 %s373, 1
          %s1391 = scalar_lea.sflag [#allocation7], %s1390
          %s1392 = sand.u32 %s373, 1
          %s1393 = smul.addr %s1392, 8
          %s1394 = scalar_lea.vmem [#allocation8], %s1393
          %1395 = dma.done %s1391, 128
        $region100: #{tpu_custom_call.1} parent=95 // pred_fallthru
          _
      $region96: #{tpu_custom_call.1} parent=5 // pred_fallthru
        _
    $region6: #{tpu_custom_call.1} parent=1 // loop_footer
      %s29 = sadd.s32 1, %s25
    $region7: #{tpu_custom_call.1} parent=1 // loop_footer_branch
      %24 = sbr.rel target = $region3
    $region8: #{tpu_custom_call.1} parent=1 // loop_exit
      _
    %1396 = vsyncpa [#allocation6], 1
    %s1397 = scalar_lea.sflag [#allocation6], 1
    %1398 = vsyncpa %s1397, 1
    %1399 = vsyncpa [#allocation7], 1
    %s1400 = scalar_lea.sflag [#allocation7], 1
    %1401 = vsyncpa %s1400, 1

</llo_original>
